<compile_context>
chip_gen: v5e
topology: v5e:2x2
jax: 0.10.0
libtpu: 0.0.40
codegen_flags: <defaults>
</compile_context>

<pallas_src>
import jax
import jax.numpy as jnp
from jax import lax
from jax.experimental import pallas as pl
from jax.experimental.pallas import tpu as pltpu

_BIG = 1.0e6
# cv2.distanceTransform(DIST_L2, maskSize=3) chamfer weights (OpenCV source).
_CHAMFER_A = 0.955    # axial step
_CHAMFER_B = 1.3693   # diagonal step


def _min_tree(xs):
    """Balanced jnp.minimum tree-reduce over a Python list of arrays."""
    while len(xs) > 1:
        nxt = [jnp.minimum(xs[i], xs[i + 1]) for i in range(0, len(xs) - 1, 2)]
        if len(xs) % 2:
            nxt.append(xs[-1])
        xs = nxt
    return xs[0]


def _chamfer_dt(d, rows, cols, H, W):
    """Exact 3x3 L2 chamfer distance transform via log-step jump relaxation.

    rows is a skinny (H, 1) int32 iota, cols a (1, W) int32 iota; the
    in-image masks broadcast inside the selects, so no full (H, W) mask
    arrays are held live across the unrolled scales.

    For each scale k (ascending powers of two), relax with jumps of length k:
    first a Jacobi min over the 4 axial directions (cost k*a), then - reading
    the updated map - a Jacobi min over the 4 diagonal directions (cost k*b).
    The chamfer-optimal path decomposes into <=1 axial and <=1 diagonal jump
    per scale (binary decomposition), and all intermediate jump points stay
    inside the source/target bounding box, so this converges exactly in
    O(log2 max(H, W)) passes.

    The diagonal pass uses only 4 rolls: the row-masked axial min m0 is
    computed once, then rolled along axis=1 by +/-k and column-masked.  This
    equals the 4-corner masked min because row_p/row_m depend only on i, so
    masking with them commutes with the axis-1 roll.
    """
    max_off = max(H, W) - 1
    k = 1
    while k <= max_off:
        row_p = rows < (H - k)     # (H, 1): reading d[i + k, j] stays in-image
        row_m = rows >= k          # (H, 1): reading d[i - k, j] stays in-image
        col_p = cols < (W - k)     # (1, W)
        col_m = cols >= k          # (1, W)

        # ---- axial jumps (cost k*a): Jacobi min-tree, single update of d --
        cands = []
        if k < H:
            dn = pltpu.roll(d, shift=H - k, axis=0)      # d[i + k, j]
            up = pltpu.roll(d, shift=k, axis=0)          # d[i - k, j]
            cands += [jnp.where(row_p, dn, _BIG), jnp.where(row_m, up, _BIG)]
        if k < W:
            rt = pltpu.roll(d, shift=W - k, axis=1)      # d[i, j + k]
            lt = pltpu.roll(d, shift=k, axis=1)          # d[i, j - k]
            cands += [jnp.where(col_p, rt, _BIG), jnp.where(col_m, lt, _BIG)]
        d = jnp.minimum(d, _min_tree(cands) + jnp.float32(k * _CHAMFER_A))

        # ---- diagonal jumps (cost k*b): 4 rolls (was 6) --------------------
        if k < H and k < W:
            dn = pltpu.roll(d, shift=H - k, axis=0)      # d[i + k, j]
            up = pltpu.roll(d, shift=k, axis=0)          # d[i - k, j]
            m0 = jnp.minimum(jnp.where(row_p, dn, _BIG),
                             jnp.where(row_m, up, _BIG))
            m_rt = pltpu.roll(m0, shift=W - k, axis=1)   # m0[i, j + k]
            m_lt = pltpu.roll(m0, shift=k, axis=1)       # m0[i, j - k]
            diag = jnp.minimum(jnp.where(col_p, m_rt, _BIG),
                               jnp.where(col_m, m_lt, _BIG))
            d = jnp.minimum(d, diag + jnp.float32(k * _CHAMFER_B))

        k *= 2
    return d


def _boundary_loss_kernel(pred_ref, tgt_ref, out_ref):
    H, W = tgt_ref.shape[1], tgt_ref.shape[2]

    # --- binarize target (mask > 0.5) --------------------------------------
    # Only the mask is needed before the DT; pred and the raw target for the
    # loss term are re-read from the (resident) pipeline refs after the DT so
    # no f32 input copy stays live across the unrolled chamfer scales.
    mask = (tgt_ref[0].astype(jnp.float32) > 0.5).astype(jnp.float32)

    # Skinny iotas and k=1 edge masks (broadcast inside the selects below).
    rows = lax.broadcasted_iota(jnp.int32, (H, 1), 0)
    cols = lax.broadcasted_iota(jnp.int32, (1, W), 1)
    row_p1 = rows < (H - 1)
    row_m1 = rows >= 1
    col_p1 = cols < (W - 1)
    col_m1 = cols >= 1

    # --- 3x3 morphological gradient (cv2.MORPH_GRADIENT, default border) ---
    # Separable dilation / erosion: row pass then column pass, reusing the
    # two axis-0 rolls of `mask` for both the max and the min pass.
    row_max = mask
    row_min = mask
    if H > 1:
        m_dn = pltpu.roll(mask, shift=H - 1, axis=0)   # mask[i + 1, j]
        m_up = pltpu.roll(mask, shift=1, axis=0)       # mask[i - 1, j]
        row_max = jnp.maximum(row_max,
                              jnp.maximum(jnp.where(row_p1, m_dn, 0.0),
                                          jnp.where(row_m1, m_up, 0.0)))
        row_min = jnp.minimum(row_min,
                              jnp.minimum(jnp.where(row_p1, m_dn, 1.0),
                                          jnp.where(row_m1, m_up, 1.0)))
    dil = row_max
    ero = row_min
    if W > 1:
        x_rt = pltpu.roll(row_max, shift=W - 1, axis=1)   # row_max[i, j + 1]
        x_lt = pltpu.roll(row_max, shift=1, axis=1)
        dil = jnp.maximum(dil, jnp.maximum(jnp.where(col_p1, x_rt, 0.0),
                                           jnp.where(col_m1, x_lt, 0.0)))
        n_rt = pltpu.roll(row_min, shift=W - 1, axis=1)
        n_lt = pltpu.roll(row_min, shift=1, axis=1)
        ero = jnp.minimum(ero, jnp.minimum(jnp.where(col_p1, n_rt, 1.0),
                                           jnp.where(col_m1, n_lt, 1.0)))
    boundary = dil - ero

    has_mask = jnp.max(mask) > 0.0
    has_bnd = jnp.max(boundary) > 0.0
    # zero-distance source set: boundary pixels if any, else the mask itself
    # (mirrors cv2.distanceTransform(1 - boundary) / (1 - mask) fallback).
    src = jnp.where(has_bnd, boundary, mask)

    # --- chamfer (3x3 L2) distance transform, log-step sweep ---------------
    dist0 = jnp.where(src > 0.0, jnp.float32(0.0), jnp.float32(_BIG))
    dist = _chamfer_dt(dist0, rows, cols, H, W)
    # Empty-mask fallback: constant max(H, W) distance map.
    dist = jnp.where(has_mask, dist, jnp.float32(max(H, W)))

    # Normalize by the per-image max.
    dmax = jnp.max(dist)
    inv = jnp.where(dmax > 0.0, 1.0 / dmax, jnp.float32(1.0))
    w = 1.0 + dist * inv

    # --- boundary-weighted loss (inputs re-read after the DT) --------------
    pred = pred_ref[0].astype(jnp.float32)   # (H, W) logits
    tgt = tgt_ref[0].astype(jnp.float32)     # (H, W) raw labels (as in ref)
    sig = jax.nn.sigmoid(pred)
    # tgt*(1 - sig) + (1 - tgt)*sig  ==  tgt + sig - 2*tgt*sig
    loss_map = w * (tgt + sig - 2.0 * tgt * sig)

    # Per-image partial sum; batch reduction happens outside the kernel.
    out_ref[0] = jnp.sum(loss_map, keepdims=True)


def boundary_loss(pred, target):
    """pred, target: (B, 1, H, W) -> scalar f32 boundary loss."""
    B, C, H, W = pred.shape
    assert C == 1, "BoundaryLoss expects single-channel inputs (B, 1, H, W)"
    # No f32 pre-cast here (kernel casts on load) -> smaller input pipeline
    # footprint for sub-f32 inputs.
    pred2 = pred.reshape(B, H, W)
    tgt2 = target.reshape(B, H, W)

    # ---- VMEM budget derived from the actual per-step working set ---------
    itemsize = max(pred2.dtype.itemsize, tgt2.dtype.itemsize)
    try:
        vmem_cap = int(pltpu.get_tpu_info().vmem_capacity_bytes)
    except Exception:
        vmem_cap = 64 * 1024 * 1024      # conservative (v7x per-TC VMEM)
    temps_bytes = 10 * H * W * 4         # live f32 temporaries during a scale

    def working_set(n_buf):
        # 2 input arrays x n_buf buffers x tile bytes + DT temporaries + slack
        return 2 * n_buf * H * W * itemsize + temps_bytes + (2 << 20)

    # Default double-buffered inputs; drop to single-buffering only when that
    # would not fit physical VMEM (very large images on v7x's 64 MiB).
    headroom = 4 * 1024 * 1024
    n_buf = 2 if working_set(2) <= vmem_cap - headroom else 1
    vmem_limit = int(min(max(working_set(n_buf), 16 * 1024 * 1024),
                         vmem_cap - headroom))

    def img_spec():
        if n_buf == 2:
            return pl.BlockSpec((1, H, W), lambda b: (b, 0, 0))
        return pl.BlockSpec((1, H, W), lambda b: (b, 0, 0),
                            pipeline_mode=pl.Buffered(1))

    num_scales = (max(H, W) - 1).bit_length()
    bytes_in = (pred2.size * pred2.dtype.itemsize
                + tgt2.size * tgt2.dtype.itemsize)
    cost = pl.CostEstimate(
        flops=int(B * H * W * (26 * num_scales + 40)),
        transcendentals=int(B * H * W),
        bytes_accessed=int(bytes_in + B * 4),
    )

    # TODO(synk): for tiny images (W << 128) pack several images per grid step
    # along the lane axis to recover vreg utilization; irrelevant for W >= 128.
    out = pl.pallas_call(
        _boundary_loss_kernel,
        out_shape=jax.ShapeDtypeStruct((B, 1, 1), jnp.float32),
        grid=(B,),
        in_specs=[img_spec(), img_spec()],
        out_specs=pl.BlockSpec((1, 1, 1), lambda b: (b, 0, 0)),
        compiler_params=pltpu.CompilerParams(
            dimension_semantics=("parallel",),
            vmem_limit_bytes=vmem_limit,
        ),
        cost_estimate=cost,
    )(pred2, tgt2)

    # Mean over all elements (B * C * H * W), finished outside the kernel so
    # the batch grid axis stays fully parallel.
    return jnp.sum(out) / jnp.float32(B * C * H * W)


if __name__ == "__main__":
    key = jax.random.PRNGKey(0)
    kp, kt = jax.random.split(key)
    B, C, H, W = 2, 1, 16, 16
    pred = jax.random.normal(kp, (B, C, H, W), dtype=jnp.float32)
    target = (jax.random.uniform(kt, (B, C, H, W)) > 0.5).astype(jnp.float32)

    loss = boundary_loss(pred, target)
    jax.block_until_ready(loss)
    assert loss.shape == () and jnp.isfinite(loss)
    print("KERNEL_OK")
</pallas_src>

<mosaic_0001>
module attributes {stable_mosaic.version = 11 : i64} {
  func.func @_boundary_loss_kernel(%arg0: i32, %arg1: memref<1x16x16xf32, #tpu.memory_space<vmem>>, %arg2: memref<1x16x16xf32, #tpu.memory_space<vmem>>, %arg3: memref<1x1x1xf32, #tpu.memory_space<vmem>>) attributes {dimension_semantics = [#tpu.dimension_semantics<parallel>], iteration_bounds = array<i64: 2>, scalar_prefetch = 0 : i64, scratch_operands = 0 : i64, tpu.core_type = #tpu.core_type<tc>, window_params = [{transform_indices = @transform_0, window_bounds = array<i64: 1, 16, 16>}, {transform_indices = @transform_1, window_bounds = array<i64: 1, 16, 16>}, {transform_indices = @transform_2, window_bounds = array<i64: 1, 1, 1>}]} {
    %c0 = arith.constant 0 : index
    %c0_0 = arith.constant 0 : index
    %c0_1 = arith.constant 0 : index
    %0 = vector.load %arg2[%c0, %c0_0, %c0_1] : memref<1x16x16xf32, #tpu.memory_space<vmem>>, vector<1x16x16xf32>
    %1 = vector.shape_cast %0 : vector<1x16x16xf32> to vector<16x16xf32>
    %cst = arith.constant 5.000000e-01 : f32
    %2 = vector.broadcast %cst : f32 to vector<16x16xf32>
    %3 = arith.cmpf ogt, %1, %2 : vector<16x16xf32>
    %4 = arith.extui %3 : vector<16x16xi1> to vector<16x16xi32>
    %5 = arith.sitofp %4 : vector<16x16xi32> to vector<16x16xf32>
    %6 = tpu.iota {dimensions = array<i32: 0>} : vector<16x1xi32>
    %7 = tpu.iota {dimensions = array<i32: 1>} : vector<1x16xi32>
    %c15_i32 = arith.constant 15 : i32
    %8 = vector.broadcast %c15_i32 : i32 to vector<16x1xi32>
    %9 = arith.cmpi slt, %6, %8 : vector<16x1xi32>
    %c1_i32 = arith.constant 1 : i32
    %10 = vector.broadcast %c1_i32 : i32 to vector<16x1xi32>
    %11 = arith.cmpi sge, %6, %10 : vector<16x1xi32>
    %c15_i32_2 = arith.constant 15 : i32
    %12 = vector.broadcast %c15_i32_2 : i32 to vector<1x16xi32>
    %13 = arith.cmpi slt, %7, %12 : vector<1x16xi32>
    %c1_i32_3 = arith.constant 1 : i32
    %14 = vector.broadcast %c1_i32_3 : i32 to vector<1x16xi32>
    %15 = arith.cmpi sge, %7, %14 : vector<1x16xi32>
    %c15_i32_4 = arith.constant 15 : i32
    %16 = tpu.dynamic_rotate %5 by %c15_i32_4 dim 0 : vector<16x16xf32>, i32 -> vector<16x16xf32>
    %c1_i32_5 = arith.constant 1 : i32
    %17 = tpu.dynamic_rotate %5 by %c1_i32_5 dim 0 : vector<16x16xf32>, i32 -> vector<16x16xf32>
    %cst_6 = arith.constant 0.000000e+00 : f32
    %18 = vector.shape_cast %9 : vector<16x1xi1> to vector<16x1xi1>
    %19 = vector.broadcast %18 : vector<16x1xi1> to vector<16x16xi1>
    %20 = vector.broadcast %cst_6 : f32 to vector<16x16xf32>
    %21 = arith.select %19, %16, %20 : vector<16x16xi1>, vector<16x16xf32>
    %cst_7 = arith.constant 0.000000e+00 : f32
    %22 = vector.shape_cast %11 : vector<16x1xi1> to vector<16x1xi1>
    %23 = vector.broadcast %22 : vector<16x1xi1> to vector<16x16xi1>
    %24 = vector.broadcast %cst_7 : f32 to vector<16x16xf32>
    %25 = arith.select %23, %17, %24 : vector<16x16xi1>, vector<16x16xf32>
    %26 = arith.maximumf %21, %25 : vector<16x16xf32>
    %27 = arith.maximumf %5, %26 : vector<16x16xf32>
    %cst_8 = arith.constant 1.000000e+00 : f32
    %28 = vector.shape_cast %9 : vector<16x1xi1> to vector<16x1xi1>
    %29 = vector.broadcast %28 : vector<16x1xi1> to vector<16x16xi1>
    %30 = vector.broadcast %cst_8 : f32 to vector<16x16xf32>
    %31 = arith.select %29, %16, %30 : vector<16x16xi1>, vector<16x16xf32>
    %cst_9 = arith.constant 1.000000e+00 : f32
    %32 = vector.shape_cast %11 : vector<16x1xi1> to vector<16x1xi1>
    %33 = vector.broadcast %32 : vector<16x1xi1> to vector<16x16xi1>
    %34 = vector.broadcast %cst_9 : f32 to vector<16x16xf32>
    %35 = arith.select %33, %17, %34 : vector<16x16xi1>, vector<16x16xf32>
    %36 = arith.minimumf %31, %35 : vector<16x16xf32>
    %37 = arith.minimumf %5, %36 : vector<16x16xf32>
    %c15_i32_10 = arith.constant 15 : i32
    %38 = tpu.dynamic_rotate %27 by %c15_i32_10 dim 1 : vector<16x16xf32>, i32 -> vector<16x16xf32>
    %c1_i32_11 = arith.constant 1 : i32
    %39 = tpu.dynamic_rotate %27 by %c1_i32_11 dim 1 : vector<16x16xf32>, i32 -> vector<16x16xf32>
    %cst_12 = arith.constant 0.000000e+00 : f32
    %40 = vector.shape_cast %13 : vector<1x16xi1> to vector<1x16xi1>
    %41 = vector.broadcast %40 : vector<1x16xi1> to vector<16x16xi1>
    %42 = vector.broadcast %cst_12 : f32 to vector<16x16xf32>
    %43 = arith.select %41, %38, %42 : vector<16x16xi1>, vector<16x16xf32>
    %cst_13 = arith.constant 0.000000e+00 : f32
    %44 = vector.shape_cast %15 : vector<1x16xi1> to vector<1x16xi1>
    %45 = vector.broadcast %44 : vector<1x16xi1> to vector<16x16xi1>
    %46 = vector.broadcast %cst_13 : f32 to vector<16x16xf32>
    %47 = arith.select %45, %39, %46 : vector<16x16xi1>, vector<16x16xf32>
    %48 = arith.maximumf %43, %47 : vector<16x16xf32>
    %49 = arith.maximumf %27, %48 : vector<16x16xf32>
    %c15_i32_14 = arith.constant 15 : i32
    %50 = tpu.dynamic_rotate %37 by %c15_i32_14 dim 1 : vector<16x16xf32>, i32 -> vector<16x16xf32>
    %c1_i32_15 = arith.constant 1 : i32
    %51 = tpu.dynamic_rotate %37 by %c1_i32_15 dim 1 : vector<16x16xf32>, i32 -> vector<16x16xf32>
    %cst_16 = arith.constant 1.000000e+00 : f32
    %52 = vector.shape_cast %13 : vector<1x16xi1> to vector<1x16xi1>
    %53 = vector.broadcast %52 : vector<1x16xi1> to vector<16x16xi1>
    %54 = vector.broadcast %cst_16 : f32 to vector<16x16xf32>
    %55 = arith.select %53, %50, %54 : vector<16x16xi1>, vector<16x16xf32>
    %cst_17 = arith.constant 1.000000e+00 : f32
    %56 = vector.shape_cast %15 : vector<1x16xi1> to vector<1x16xi1>
    %57 = vector.broadcast %56 : vector<1x16xi1> to vector<16x16xi1>
    %58 = vector.broadcast %cst_17 : f32 to vector<16x16xf32>
    %59 = arith.select %57, %51, %58 : vector<16x16xi1>, vector<16x16xf32>
    %60 = arith.minimumf %55, %59 : vector<16x16xf32>
    %61 = arith.minimumf %37, %60 : vector<16x16xf32>
    %62 = arith.subf %49, %61 : vector<16x16xf32>
    %63 = vector.shape_cast %5 : vector<16x16xf32> to vector<1x16x16xf32>
    %cst_18 = arith.constant dense<0xFF800000> : vector<1xf32>
    %64 = vector.multi_reduction <maximumf>, %63, %cst_18 [1, 2] : vector<1x16x16xf32> to vector<1xf32>
    %65 = vector.shape_cast %64 : vector<1xf32> to vector<1x1x1xf32>
    %66 = vector.extract %65[0, 0, 0] : f32 from vector<1x1x1xf32>
    %cst_19 = arith.constant 0.000000e+00 : f32
    %67 = arith.cmpf ogt, %66, %cst_19 : f32
    %68 = vector.shape_cast %62 : vector<16x16xf32> to vector<1x16x16xf32>
    %cst_20 = arith.constant dense<0xFF800000> : vector<1xf32>
    %69 = vector.multi_reduction <maximumf>, %68, %cst_20 [1, 2] : vector<1x16x16xf32> to vector<1xf32>
    %70 = vector.shape_cast %69 : vector<1xf32> to vector<1x1x1xf32>
    %71 = vector.extract %70[0, 0, 0] : f32 from vector<1x1x1xf32>
    %cst_21 = arith.constant 0.000000e+00 : f32
    %72 = arith.cmpf ogt, %71, %cst_21 : f32
    %73 = arith.select %72, %62, %5 : vector<16x16xf32>
    %cst_22 = arith.constant 0.000000e+00 : f32
    %74 = vector.broadcast %cst_22 : f32 to vector<16x16xf32>
    %75 = arith.cmpf ogt, %73, %74 : vector<16x16xf32>
    %cst_23 = arith.constant 0.000000e+00 : f32
    %cst_24 = arith.constant 1.000000e+06 : f32
    %76 = vector.broadcast %cst_23 : f32 to vector<16x16xf32>
    %77 = vector.broadcast %cst_24 : f32 to vector<16x16xf32>
    %78 = arith.select %75, %76, %77 : vector<16x16xi1>, vector<16x16xf32>
    %c15_i32_25 = arith.constant 15 : i32
    %79 = vector.broadcast %c15_i32_25 : i32 to vector<16x1xi32>
    %80 = arith.cmpi slt, %6, %79 : vector<16x1xi32>
    %c1_i32_26 = arith.constant 1 : i32
    %81 = vector.broadcast %c1_i32_26 : i32 to vector<16x1xi32>
    %82 = arith.cmpi sge, %6, %81 : vector<16x1xi32>
    %c15_i32_27 = arith.constant 15 : i32
    %83 = vector.broadcast %c15_i32_27 : i32 to vector<1x16xi32>
    %84 = arith.cmpi slt, %7, %83 : vector<1x16xi32>
    %c1_i32_28 = arith.constant 1 : i32
    %85 = vector.broadcast %c1_i32_28 : i32 to vector<1x16xi32>
    %86 = arith.cmpi sge, %7, %85 : vector<1x16xi32>
    %c15_i32_29 = arith.constant 15 : i32
    %87 = tpu.dynamic_rotate %78 by %c15_i32_29 dim 0 : vector<16x16xf32>, i32 -> vector<16x16xf32>
    %c1_i32_30 = arith.constant 1 : i32
    %88 = tpu.dynamic_rotate %78 by %c1_i32_30 dim 0 : vector<16x16xf32>, i32 -> vector<16x16xf32>
    %cst_31 = arith.constant 1.000000e+06 : f32
    %89 = vector.shape_cast %80 : vector<16x1xi1> to vector<16x1xi1>
    %90 = vector.broadcast %89 : vector<16x1xi1> to vector<16x16xi1>
    %91 = vector.broadcast %cst_31 : f32 to vector<16x16xf32>
    %92 = arith.select %90, %87, %91 : vector<16x16xi1>, vector<16x16xf32>
    %cst_32 = arith.constant 1.000000e+06 : f32
    %93 = vector.shape_cast %82 : vector<16x1xi1> to vector<16x1xi1>
    %94 = vector.broadcast %93 : vector<16x1xi1> to vector<16x16xi1>
    %95 = vector.broadcast %cst_32 : f32 to vector<16x16xf32>
    %96 = arith.select %94, %88, %95 : vector<16x16xi1>, vector<16x16xf32>
    %c15_i32_33 = arith.constant 15 : i32
    %97 = tpu.dynamic_rotate %78 by %c15_i32_33 dim 1 : vector<16x16xf32>, i32 -> vector<16x16xf32>
    %c1_i32_34 = arith.constant 1 : i32
    %98 = tpu.dynamic_rotate %78 by %c1_i32_34 dim 1 : vector<16x16xf32>, i32 -> vector<16x16xf32>
    %cst_35 = arith.constant 1.000000e+06 : f32
    %99 = vector.shape_cast %84 : vector<1x16xi1> to vector<1x16xi1>
    %100 = vector.broadcast %99 : vector<1x16xi1> to vector<16x16xi1>
    %101 = vector.broadcast %cst_35 : f32 to vector<16x16xf32>
    %102 = arith.select %100, %97, %101 : vector<16x16xi1>, vector<16x16xf32>
    %cst_36 = arith.constant 1.000000e+06 : f32
    %103 = vector.shape_cast %86 : vector<1x16xi1> to vector<1x16xi1>
    %104 = vector.broadcast %103 : vector<1x16xi1> to vector<16x16xi1>
    %105 = vector.broadcast %cst_36 : f32 to vector<16x16xf32>
    %106 = arith.select %104, %98, %105 : vector<16x16xi1>, vector<16x16xf32>
    %107 = arith.minimumf %92, %96 : vector<16x16xf32>
    %108 = arith.minimumf %102, %106 : vector<16x16xf32>
    %109 = arith.minimumf %107, %108 : vector<16x16xf32>
    %cst_37 = arith.constant 0.954999983 : f32
    %110 = vector.broadcast %cst_37 : f32 to vector<16x16xf32>
    %111 = arith.addf %109, %110 : vector<16x16xf32>
    %112 = arith.minimumf %78, %111 : vector<16x16xf32>
    %c15_i32_38 = arith.constant 15 : i32
    %113 = tpu.dynamic_rotate %112 by %c15_i32_38 dim 0 : vector<16x16xf32>, i32 -> vector<16x16xf32>
    %c1_i32_39 = arith.constant 1 : i32
    %114 = tpu.dynamic_rotate %112 by %c1_i32_39 dim 0 : vector<16x16xf32>, i32 -> vector<16x16xf32>
    %cst_40 = arith.constant 1.000000e+06 : f32
    %115 = vector.shape_cast %80 : vector<16x1xi1> to vector<16x1xi1>
    %116 = vector.broadcast %115 : vector<16x1xi1> to vector<16x16xi1>
    %117 = vector.broadcast %cst_40 : f32 to vector<16x16xf32>
    %118 = arith.select %116, %113, %117 : vector<16x16xi1>, vector<16x16xf32>
    %cst_41 = arith.constant 1.000000e+06 : f32
    %119 = vector.shape_cast %82 : vector<16x1xi1> to vector<16x1xi1>
    %120 = vector.broadcast %119 : vector<16x1xi1> to vector<16x16xi1>
    %121 = vector.broadcast %cst_41 : f32 to vector<16x16xf32>
    %122 = arith.select %120, %114, %121 : vector<16x16xi1>, vector<16x16xf32>
    %123 = arith.minimumf %118, %122 : vector<16x16xf32>
    %c15_i32_42 = arith.constant 15 : i32
    %124 = tpu.dynamic_rotate %123 by %c15_i32_42 dim 1 : vector<16x16xf32>, i32 -> vector<16x16xf32>
    %c1_i32_43 = arith.constant 1 : i32
    %125 = tpu.dynamic_rotate %123 by %c1_i32_43 dim 1 : vector<16x16xf32>, i32 -> vector<16x16xf32>
    %cst_44 = arith.constant 1.000000e+06 : f32
    %126 = vector.shape_cast %84 : vector<1x16xi1> to vector<1x16xi1>
    %127 = vector.broadcast %126 : vector<1x16xi1> to vector<16x16xi1>
    %128 = vector.broadcast %cst_44 : f32 to vector<16x16xf32>
    %129 = arith.select %127, %124, %128 : vector<16x16xi1>, vector<16x16xf32>
    %cst_45 = arith.constant 1.000000e+06 : f32
    %130 = vector.shape_cast %86 : vector<1x16xi1> to vector<1x16xi1>
    %131 = vector.broadcast %130 : vector<1x16xi1> to vector<16x16xi1>
    %132 = vector.broadcast %cst_45 : f32 to vector<16x16xf32>
    %133 = arith.select %131, %125, %132 : vector<16x16xi1>, vector<16x16xf32>
    %134 = arith.minimumf %129, %133 : vector<16x16xf32>
    %cst_46 = arith.constant 1.369300e+00 : f32
    %135 = vector.broadcast %cst_46 : f32 to vector<16x16xf32>
    %136 = arith.addf %134, %135 : vector<16x16xf32>
    %137 = arith.minimumf %112, %136 : vector<16x16xf32>
    %c14_i32 = arith.constant 14 : i32
    %138 = vector.broadcast %c14_i32 : i32 to vector<16x1xi32>
    %139 = arith.cmpi slt, %6, %138 : vector<16x1xi32>
    %c2_i32 = arith.constant 2 : i32
    %140 = vector.broadcast %c2_i32 : i32 to vector<16x1xi32>
    %141 = arith.cmpi sge, %6, %140 : vector<16x1xi32>
    %c14_i32_47 = arith.constant 14 : i32
    %142 = vector.broadcast %c14_i32_47 : i32 to vector<1x16xi32>
    %143 = arith.cmpi slt, %7, %142 : vector<1x16xi32>
    %c2_i32_48 = arith.constant 2 : i32
    %144 = vector.broadcast %c2_i32_48 : i32 to vector<1x16xi32>
    %145 = arith.cmpi sge, %7, %144 : vector<1x16xi32>
    %c14_i32_49 = arith.constant 14 : i32
    %146 = tpu.dynamic_rotate %137 by %c14_i32_49 dim 0 : vector<16x16xf32>, i32 -> vector<16x16xf32>
    %c2_i32_50 = arith.constant 2 : i32
    %147 = tpu.dynamic_rotate %137 by %c2_i32_50 dim 0 : vector<16x16xf32>, i32 -> vector<16x16xf32>
    %cst_51 = arith.constant 1.000000e+06 : f32
    %148 = vector.shape_cast %139 : vector<16x1xi1> to vector<16x1xi1>
    %149 = vector.broadcast %148 : vector<16x1xi1> to vector<16x16xi1>
    %150 = vector.broadcast %cst_51 : f32 to vector<16x16xf32>
    %151 = arith.select %149, %146, %150 : vector<16x16xi1>, vector<16x16xf32>
    %cst_52 = arith.constant 1.000000e+06 : f32
    %152 = vector.shape_cast %141 : vector<16x1xi1> to vector<16x1xi1>
    %153 = vector.broadcast %152 : vector<16x1xi1> to vector<16x16xi1>
    %154 = vector.broadcast %cst_52 : f32 to vector<16x16xf32>
    %155 = arith.select %153, %147, %154 : vector<16x16xi1>, vector<16x16xf32>
    %c14_i32_53 = arith.constant 14 : i32
    %156 = tpu.dynamic_rotate %137 by %c14_i32_53 dim 1 : vector<16x16xf32>, i32 -> vector<16x16xf32>
    %c2_i32_54 = arith.constant 2 : i32
    %157 = tpu.dynamic_rotate %137 by %c2_i32_54 dim 1 : vector<16x16xf32>, i32 -> vector<16x16xf32>
    %cst_55 = arith.constant 1.000000e+06 : f32
    %158 = vector.shape_cast %143 : vector<1x16xi1> to vector<1x16xi1>
    %159 = vector.broadcast %158 : vector<1x16xi1> to vector<16x16xi1>
    %160 = vector.broadcast %cst_55 : f32 to vector<16x16xf32>
    %161 = arith.select %159, %156, %160 : vector<16x16xi1>, vector<16x16xf32>
    %cst_56 = arith.constant 1.000000e+06 : f32
    %162 = vector.shape_cast %145 : vector<1x16xi1> to vector<1x16xi1>
    %163 = vector.broadcast %162 : vector<1x16xi1> to vector<16x16xi1>
    %164 = vector.broadcast %cst_56 : f32 to vector<16x16xf32>
    %165 = arith.select %163, %157, %164 : vector<16x16xi1>, vector<16x16xf32>
    %166 = arith.minimumf %151, %155 : vector<16x16xf32>
    %167 = arith.minimumf %161, %165 : vector<16x16xf32>
    %168 = arith.minimumf %166, %167 : vector<16x16xf32>
    %cst_57 = arith.constant 1.910000e+00 : f32
    %169 = vector.broadcast %cst_57 : f32 to vector<16x16xf32>
    %170 = arith.addf %168, %169 : vector<16x16xf32>
    %171 = arith.minimumf %137, %170 : vector<16x16xf32>
    %c14_i32_58 = arith.constant 14 : i32
    %172 = tpu.dynamic_rotate %171 by %c14_i32_58 dim 0 : vector<16x16xf32>, i32 -> vector<16x16xf32>
    %c2_i32_59 = arith.constant 2 : i32
    %173 = tpu.dynamic_rotate %171 by %c2_i32_59 dim 0 : vector<16x16xf32>, i32 -> vector<16x16xf32>
    %cst_60 = arith.constant 1.000000e+06 : f32
    %174 = vector.shape_cast %139 : vector<16x1xi1> to vector<16x1xi1>
    %175 = vector.broadcast %174 : vector<16x1xi1> to vector<16x16xi1>
    %176 = vector.broadcast %cst_60 : f32 to vector<16x16xf32>
    %177 = arith.select %175, %172, %176 : vector<16x16xi1>, vector<16x16xf32>
    %cst_61 = arith.constant 1.000000e+06 : f32
    %178 = vector.shape_cast %141 : vector<16x1xi1> to vector<16x1xi1>
    %179 = vector.broadcast %178 : vector<16x1xi1> to vector<16x16xi1>
    %180 = vector.broadcast %cst_61 : f32 to vector<16x16xf32>
    %181 = arith.select %179, %173, %180 : vector<16x16xi1>, vector<16x16xf32>
    %182 = arith.minimumf %177, %181 : vector<16x16xf32>
    %c14_i32_62 = arith.constant 14 : i32
    %183 = tpu.dynamic_rotate %182 by %c14_i32_62 dim 1 : vector<16x16xf32>, i32 -> vector<16x16xf32>
    %c2_i32_63 = arith.constant 2 : i32
    %184 = tpu.dynamic_rotate %182 by %c2_i32_63 dim 1 : vector<16x16xf32>, i32 -> vector<16x16xf32>
    %cst_64 = arith.constant 1.000000e+06 : f32
    %185 = vector.shape_cast %143 : vector<1x16xi1> to vector<1x16xi1>
    %186 = vector.broadcast %185 : vector<1x16xi1> to vector<16x16xi1>
    %187 = vector.broadcast %cst_64 : f32 to vector<16x16xf32>
    %188 = arith.select %186, %183, %187 : vector<16x16xi1>, vector<16x16xf32>
    %cst_65 = arith.constant 1.000000e+06 : f32
    %189 = vector.shape_cast %145 : vector<1x16xi1> to vector<1x16xi1>
    %190 = vector.broadcast %189 : vector<1x16xi1> to vector<16x16xi1>
    %191 = vector.broadcast %cst_65 : f32 to vector<16x16xf32>
    %192 = arith.select %190, %184, %191 : vector<16x16xi1>, vector<16x16xf32>
    %193 = arith.minimumf %188, %192 : vector<16x16xf32>
    %cst_66 = arith.constant 2.738600e+00 : f32
    %194 = vector.broadcast %cst_66 : f32 to vector<16x16xf32>
    %195 = arith.addf %193, %194 : vector<16x16xf32>
    %196 = arith.minimumf %171, %195 : vector<16x16xf32>
    %c12_i32 = arith.constant 12 : i32
    %197 = vector.broadcast %c12_i32 : i32 to vector<16x1xi32>
    %198 = arith.cmpi slt, %6, %197 : vector<16x1xi32>
    %c4_i32 = arith.constant 4 : i32
    %199 = vector.broadcast %c4_i32 : i32 to vector<16x1xi32>
    %200 = arith.cmpi sge, %6, %199 : vector<16x1xi32>
    %c12_i32_67 = arith.constant 12 : i32
    %201 = vector.broadcast %c12_i32_67 : i32 to vector<1x16xi32>
    %202 = arith.cmpi slt, %7, %201 : vector<1x16xi32>
    %c4_i32_68 = arith.constant 4 : i32
    %203 = vector.broadcast %c4_i32_68 : i32 to vector<1x16xi32>
    %204 = arith.cmpi sge, %7, %203 : vector<1x16xi32>
    %c12_i32_69 = arith.constant 12 : i32
    %205 = tpu.dynamic_rotate %196 by %c12_i32_69 dim 0 : vector<16x16xf32>, i32 -> vector<16x16xf32>
    %c4_i32_70 = arith.constant 4 : i32
    %206 = tpu.dynamic_rotate %196 by %c4_i32_70 dim 0 : vector<16x16xf32>, i32 -> vector<16x16xf32>
    %cst_71 = arith.constant 1.000000e+06 : f32
    %207 = vector.shape_cast %198 : vector<16x1xi1> to vector<16x1xi1>
    %208 = vector.broadcast %207 : vector<16x1xi1> to vector<16x16xi1>
    %209 = vector.broadcast %cst_71 : f32 to vector<16x16xf32>
    %210 = arith.select %208, %205, %209 : vector<16x16xi1>, vector<16x16xf32>
    %cst_72 = arith.constant 1.000000e+06 : f32
    %211 = vector.shape_cast %200 : vector<16x1xi1> to vector<16x1xi1>
    %212 = vector.broadcast %211 : vector<16x1xi1> to vector<16x16xi1>
    %213 = vector.broadcast %cst_72 : f32 to vector<16x16xf32>
    %214 = arith.select %212, %206, %213 : vector<16x16xi1>, vector<16x16xf32>
    %c12_i32_73 = arith.constant 12 : i32
    %215 = tpu.dynamic_rotate %196 by %c12_i32_73 dim 1 : vector<16x16xf32>, i32 -> vector<16x16xf32>
    %c4_i32_74 = arith.constant 4 : i32
    %216 = tpu.dynamic_rotate %196 by %c4_i32_74 dim 1 : vector<16x16xf32>, i32 -> vector<16x16xf32>
    %cst_75 = arith.constant 1.000000e+06 : f32
    %217 = vector.shape_cast %202 : vector<1x16xi1> to vector<1x16xi1>
    %218 = vector.broadcast %217 : vector<1x16xi1> to vector<16x16xi1>
    %219 = vector.broadcast %cst_75 : f32 to vector<16x16xf32>
    %220 = arith.select %218, %215, %219 : vector<16x16xi1>, vector<16x16xf32>
    %cst_76 = arith.constant 1.000000e+06 : f32
    %221 = vector.shape_cast %204 : vector<1x16xi1> to vector<1x16xi1>
    %222 = vector.broadcast %221 : vector<1x16xi1> to vector<16x16xi1>
    %223 = vector.broadcast %cst_76 : f32 to vector<16x16xf32>
    %224 = arith.select %222, %216, %223 : vector<16x16xi1>, vector<16x16xf32>
    %225 = arith.minimumf %210, %214 : vector<16x16xf32>
    %226 = arith.minimumf %220, %224 : vector<16x16xf32>
    %227 = arith.minimumf %225, %226 : vector<16x16xf32>
    %cst_77 = arith.constant 3.820000e+00 : f32
    %228 = vector.broadcast %cst_77 : f32 to vector<16x16xf32>
    %229 = arith.addf %227, %228 : vector<16x16xf32>
    %230 = arith.minimumf %196, %229 : vector<16x16xf32>
    %c12_i32_78 = arith.constant 12 : i32
    %231 = tpu.dynamic_rotate %230 by %c12_i32_78 dim 0 : vector<16x16xf32>, i32 -> vector<16x16xf32>
    %c4_i32_79 = arith.constant 4 : i32
    %232 = tpu.dynamic_rotate %230 by %c4_i32_79 dim 0 : vector<16x16xf32>, i32 -> vector<16x16xf32>
    %cst_80 = arith.constant 1.000000e+06 : f32
    %233 = vector.shape_cast %198 : vector<16x1xi1> to vector<16x1xi1>
    %234 = vector.broadcast %233 : vector<16x1xi1> to vector<16x16xi1>
    %235 = vector.broadcast %cst_80 : f32 to vector<16x16xf32>
    %236 = arith.select %234, %231, %235 : vector<16x16xi1>, vector<16x16xf32>
    %cst_81 = arith.constant 1.000000e+06 : f32
    %237 = vector.shape_cast %200 : vector<16x1xi1> to vector<16x1xi1>
    %238 = vector.broadcast %237 : vector<16x1xi1> to vector<16x16xi1>
    %239 = vector.broadcast %cst_81 : f32 to vector<16x16xf32>
    %240 = arith.select %238, %232, %239 : vector<16x16xi1>, vector<16x16xf32>
    %241 = arith.minimumf %236, %240 : vector<16x16xf32>
    %c12_i32_82 = arith.constant 12 : i32
    %242 = tpu.dynamic_rotate %241 by %c12_i32_82 dim 1 : vector<16x16xf32>, i32 -> vector<16x16xf32>
    %c4_i32_83 = arith.constant 4 : i32
    %243 = tpu.dynamic_rotate %241 by %c4_i32_83 dim 1 : vector<16x16xf32>, i32 -> vector<16x16xf32>
    %cst_84 = arith.constant 1.000000e+06 : f32
    %244 = vector.shape_cast %202 : vector<1x16xi1> to vector<1x16xi1>
    %245 = vector.broadcast %244 : vector<1x16xi1> to vector<16x16xi1>
    %246 = vector.broadcast %cst_84 : f32 to vector<16x16xf32>
    %247 = arith.select %245, %242, %246 : vector<16x16xi1>, vector<16x16xf32>
    %cst_85 = arith.constant 1.000000e+06 : f32
    %248 = vector.shape_cast %204 : vector<1x16xi1> to vector<1x16xi1>
    %249 = vector.broadcast %248 : vector<1x16xi1> to vector<16x16xi1>
    %250 = vector.broadcast %cst_85 : f32 to vector<16x16xf32>
    %251 = arith.select %249, %243, %250 : vector<16x16xi1>, vector<16x16xf32>
    %252 = arith.minimumf %247, %251 : vector<16x16xf32>
    %cst_86 = arith.constant 5.477200e+00 : f32
    %253 = vector.broadcast %cst_86 : f32 to vector<16x16xf32>
    %254 = arith.addf %252, %253 : vector<16x16xf32>
    %255 = arith.minimumf %230, %254 : vector<16x16xf32>
    %c8_i32 = arith.constant 8 : i32
    %256 = vector.broadcast %c8_i32 : i32 to vector<16x1xi32>
    %257 = arith.cmpi slt, %6, %256 : vector<16x1xi32>
    %c8_i32_87 = arith.constant 8 : i32
    %258 = vector.broadcast %c8_i32_87 : i32 to vector<16x1xi32>
    %259 = arith.cmpi sge, %6, %258 : vector<16x1xi32>
    %c8_i32_88 = arith.constant 8 : i32
    %260 = vector.broadcast %c8_i32_88 : i32 to vector<1x16xi32>
    %261 = arith.cmpi slt, %7, %260 : vector<1x16xi32>
    %c8_i32_89 = arith.constant 8 : i32
    %262 = vector.broadcast %c8_i32_89 : i32 to vector<1x16xi32>
    %263 = arith.cmpi sge, %7, %262 : vector<1x16xi32>
    %c8_i32_90 = arith.constant 8 : i32
    %264 = tpu.dynamic_rotate %255 by %c8_i32_90 dim 0 : vector<16x16xf32>, i32 -> vector<16x16xf32>
    %c8_i32_91 = arith.constant 8 : i32
    %265 = tpu.dynamic_rotate %255 by %c8_i32_91 dim 0 : vector<16x16xf32>, i32 -> vector<16x16xf32>
    %cst_92 = arith.constant 1.000000e+06 : f32
    %266 = vector.shape_cast %257 : vector<16x1xi1> to vector<16x1xi1>
    %267 = vector.broadcast %266 : vector<16x1xi1> to vector<16x16xi1>
    %268 = vector.broadcast %cst_92 : f32 to vector<16x16xf32>
    %269 = arith.select %267, %264, %268 : vector<16x16xi1>, vector<16x16xf32>
    %cst_93 = arith.constant 1.000000e+06 : f32
    %270 = vector.shape_cast %259 : vector<16x1xi1> to vector<16x1xi1>
    %271 = vector.broadcast %270 : vector<16x1xi1> to vector<16x16xi1>
    %272 = vector.broadcast %cst_93 : f32 to vector<16x16xf32>
    %273 = arith.select %271, %265, %272 : vector<16x16xi1>, vector<16x16xf32>
    %c8_i32_94 = arith.constant 8 : i32
    %274 = tpu.dynamic_rotate %255 by %c8_i32_94 dim 1 : vector<16x16xf32>, i32 -> vector<16x16xf32>
    %c8_i32_95 = arith.constant 8 : i32
    %275 = tpu.dynamic_rotate %255 by %c8_i32_95 dim 1 : vector<16x16xf32>, i32 -> vector<16x16xf32>
    %cst_96 = arith.constant 1.000000e+06 : f32
    %276 = vector.shape_cast %261 : vector<1x16xi1> to vector<1x16xi1>
    %277 = vector.broadcast %276 : vector<1x16xi1> to vector<16x16xi1>
    %278 = vector.broadcast %cst_96 : f32 to vector<16x16xf32>
    %279 = arith.select %277, %274, %278 : vector<16x16xi1>, vector<16x16xf32>
    %cst_97 = arith.constant 1.000000e+06 : f32
    %280 = vector.shape_cast %263 : vector<1x16xi1> to vector<1x16xi1>
    %281 = vector.broadcast %280 : vector<1x16xi1> to vector<16x16xi1>
    %282 = vector.broadcast %cst_97 : f32 to vector<16x16xf32>
    %283 = arith.select %281, %275, %282 : vector<16x16xi1>, vector<16x16xf32>
    %284 = arith.minimumf %269, %273 : vector<16x16xf32>
    %285 = arith.minimumf %279, %283 : vector<16x16xf32>
    %286 = arith.minimumf %284, %285 : vector<16x16xf32>
    %cst_98 = arith.constant 7.640000e+00 : f32
    %287 = vector.broadcast %cst_98 : f32 to vector<16x16xf32>
    %288 = arith.addf %286, %287 : vector<16x16xf32>
    %289 = arith.minimumf %255, %288 : vector<16x16xf32>
    %c8_i32_99 = arith.constant 8 : i32
    %290 = tpu.dynamic_rotate %289 by %c8_i32_99 dim 0 : vector<16x16xf32>, i32 -> vector<16x16xf32>
    %c8_i32_100 = arith.constant 8 : i32
    %291 = tpu.dynamic_rotate %289 by %c8_i32_100 dim 0 : vector<16x16xf32>, i32 -> vector<16x16xf32>
    %cst_101 = arith.constant 1.000000e+06 : f32
    %292 = vector.shape_cast %257 : vector<16x1xi1> to vector<16x1xi1>
    %293 = vector.broadcast %292 : vector<16x1xi1> to vector<16x16xi1>
    %294 = vector.broadcast %cst_101 : f32 to vector<16x16xf32>
    %295 = arith.select %293, %290, %294 : vector<16x16xi1>, vector<16x16xf32>
    %cst_102 = arith.constant 1.000000e+06 : f32
    %296 = vector.shape_cast %259 : vector<16x1xi1> to vector<16x1xi1>
    %297 = vector.broadcast %296 : vector<16x1xi1> to vector<16x16xi1>
    %298 = vector.broadcast %cst_102 : f32 to vector<16x16xf32>
    %299 = arith.select %297, %291, %298 : vector<16x16xi1>, vector<16x16xf32>
    %300 = arith.minimumf %295, %299 : vector<16x16xf32>
    %c8_i32_103 = arith.constant 8 : i32
    %301 = tpu.dynamic_rotate %300 by %c8_i32_103 dim 1 : vector<16x16xf32>, i32 -> vector<16x16xf32>
    %c8_i32_104 = arith.constant 8 : i32
    %302 = tpu.dynamic_rotate %300 by %c8_i32_104 dim 1 : vector<16x16xf32>, i32 -> vector<16x16xf32>
    %cst_105 = arith.constant 1.000000e+06 : f32
    %303 = vector.shape_cast %261 : vector<1x16xi1> to vector<1x16xi1>
    %304 = vector.broadcast %303 : vector<1x16xi1> to vector<16x16xi1>
    %305 = vector.broadcast %cst_105 : f32 to vector<16x16xf32>
    %306 = arith.select %304, %301, %305 : vector<16x16xi1>, vector<16x16xf32>
    %cst_106 = arith.constant 1.000000e+06 : f32
    %307 = vector.shape_cast %263 : vector<1x16xi1> to vector<1x16xi1>
    %308 = vector.broadcast %307 : vector<1x16xi1> to vector<16x16xi1>
    %309 = vector.broadcast %cst_106 : f32 to vector<16x16xf32>
    %310 = arith.select %308, %302, %309 : vector<16x16xi1>, vector<16x16xf32>
    %311 = arith.minimumf %306, %310 : vector<16x16xf32>
    %cst_107 = arith.constant 1.095440e+01 : f32
    %312 = vector.broadcast %cst_107 : f32 to vector<16x16xf32>
    %313 = arith.addf %311, %312 : vector<16x16xf32>
    %314 = arith.minimumf %289, %313 : vector<16x16xf32>
    %cst_108 = arith.constant 1.600000e+01 : f32
    %315 = vector.broadcast %cst_108 : f32 to vector<16x16xf32>
    %316 = arith.select %67, %314, %315 : vector<16x16xf32>
    %317 = vector.shape_cast %316 : vector<16x16xf32> to vector<1x16x16xf32>
    %cst_109 = arith.constant dense<0xFF800000> : vector<1xf32>
    %318 = vector.multi_reduction <maximumf>, %317, %cst_109 [1, 2] : vector<1x16x16xf32> to vector<1xf32>
    %319 = vector.shape_cast %318 : vector<1xf32> to vector<1x1x1xf32>
    %320 = vector.extract %319[0, 0, 0] : f32 from vector<1x1x1xf32>
    %cst_110 = arith.constant 0.000000e+00 : f32
    %321 = arith.cmpf ogt, %320, %cst_110 : f32
    %cst_111 = arith.constant 1.000000e+00 : f32
    %322 = arith.divf %cst_111, %320 : f32
    %cst_112 = arith.constant 1.000000e+00 : f32
    %323 = arith.select %321, %322, %cst_112 : f32
    %324 = vector.broadcast %323 : f32 to vector<16x16xf32>
    %325 = arith.mulf %316, %324 : vector<16x16xf32>
    %cst_113 = arith.constant 1.000000e+00 : f32
    %326 = vector.broadcast %cst_113 : f32 to vector<16x16xf32>
    %327 = arith.addf %326, %325 : vector<16x16xf32>
    %c0_114 = arith.constant 0 : index
    %c0_115 = arith.constant 0 : index
    %c0_116 = arith.constant 0 : index
    %328 = vector.load %arg1[%c0_114, %c0_115, %c0_116] : memref<1x16x16xf32, #tpu.memory_space<vmem>>, vector<1x16x16xf32>
    %329 = vector.shape_cast %328 : vector<1x16x16xf32> to vector<16x16xf32>
    %c0_117 = arith.constant 0 : index
    %c0_118 = arith.constant 0 : index
    %c0_119 = arith.constant 0 : index
    %330 = vector.load %arg2[%c0_117, %c0_118, %c0_119] : memref<1x16x16xf32, #tpu.memory_space<vmem>>, vector<1x16x16xf32>
    %331 = vector.shape_cast %330 : vector<1x16x16xf32> to vector<16x16xf32>
    %332 = arith.negf %329 : vector<16x16xf32>
    %333 = math.exp %332 : vector<16x16xf32>
    %cst_120 = arith.constant 1.000000e+00 : f32
    %334 = vector.broadcast %cst_120 : f32 to vector<16x16xf32>
    %335 = arith.addf %334, %333 : vector<16x16xf32>
    %336 = arith.divf %334, %335 : vector<16x16xf32>
    %337 = arith.addf %331, %336 : vector<16x16xf32>
    %cst_121 = arith.constant 2.000000e+00 : f32
    %338 = vector.broadcast %cst_121 : f32 to vector<16x16xf32>
    %339 = arith.mulf %338, %331 : vector<16x16xf32>
    %340 = arith.mulf %339, %336 : vector<16x16xf32>
    %341 = arith.subf %337, %340 : vector<16x16xf32>
    %342 = arith.mulf %327, %341 : vector<16x16xf32>
    %343 = vector.shape_cast %342 : vector<16x16xf32> to vector<1x16x16xf32>
    %cst_122 = arith.constant dense<0.000000e+00> : vector<1xf32>
    %344 = vector.multi_reduction <add>, %343, %cst_122 [1, 2] : vector<1x16x16xf32> to vector<1xf32>
    %345 = vector.shape_cast %344 : vector<1xf32> to vector<1x1x1xf32>
    %346 = vector.extract %345[0, 0, 0] : f32 from vector<1x1x1xf32>
    %347 = vector.broadcast %346 : f32 to vector<1x1xf32>
    %c0_123 = arith.constant 0 : index
    %c0_124 = arith.constant 0 : index
    %c0_125 = arith.constant 0 : index
    %348 = vector.load %arg3[%c0_123, %c0_124, %c0_125] : memref<1x1x1xf32, #tpu.memory_space<vmem>>, vector<1x1x1xf32>
    %349 = vector.shape_cast %348 : vector<1x1x1xf32> to vector<1x1xf32>
    %350 = vector.shape_cast %347 : vector<1x1xf32> to vector<1x1x1xf32>
    tpu.vector_store %arg3[%c0_123, %c0_124, %c0_125], %350 {strides = array<i32>} : memref<1x1x1xf32, #tpu.memory_space<vmem>>, vector<1x1x1xf32>,
    return
  }
  func.func @transform_0(%arg0: i32) -> (i32, i32, i32) {
    %c0_i32 = arith.constant 0 : i32
    %c0_i32_0 = arith.constant 0 : i32
    %c0_i32_1 = arith.constant 0 : i32
    return %arg0, %c0_i32, %c0_i32_0 : i32, i32, i32
  }
  func.func @transform_1(%arg0: i32) -> (i32, i32, i32) {
    %c0_i32 = arith.constant 0 : i32
    %c0_i32_0 = arith.constant 0 : i32
    %c0_i32_1 = arith.constant 0 : i32
    return %arg0, %c0_i32, %c0_i32_0 : i32, i32, i32
  }
  func.func @transform_2(%arg0: i32) -> (i32, i32, i32) {
    %c0_i32 = arith.constant 0 : i32
    %c0_i32_0 = arith.constant 0 : i32
    %c0_i32_1 = arith.constant 0 : i32
    return %arg0, %c0_i32, %c0_i32_0 : i32, i32, i32
  }
}

</mosaic_0001>

<llo_original>
// kernel: tpu_custom_call.1
$region0: #{tpu_custom_call.1}
  #allocation0 [shape = 'u32[]', space=smem, size = 0x4, offset = 0x4, fixed_abs, tag = 'smem constant byte address 0x4 - core index']
  #allocation1 [shape = 'u32[72,128]{1,0:T(1,128)}', space=vmem, size = 0x9000, scoped, tag = 'internal scratch']
  %s0 = inlined_call_operand.hbm [shape: f32[2,16,16], index: 0, kind: input, shape index: {}]
  %s1 = inlined_call_operand.hbm [shape: f32[2,16,16], index: 1, kind: input, shape index: {}]
  %s2 = inlined_call_operand.vmem [shape: f32[2,1,1], index: 2, kind: output, shape index: {}]
  %s3 = sld [smem:[#allocation0]]
  $region49: #{tpu_custom_call.1} parent=0
    _
  %s5 = ssub.s32 1, %s3
  %s6 = scalar_select 0, %s5, %s3
  $region1: #{tpu_custom_call.1} parent=0
    #allocation2 [shape = 'u8[16384]{0}', space=vmem, size = 0x4000, scoped, tag = 'input window, operand 0']
    #allocation3 [shape = 's32[2]{0}', space=sflag, size = 0x8, scoped, tag = 'scoped memory for tpu_custom_call.1']
    #allocation4 [shape = 'u8[16384]{0}', space=vmem, size = 0x4000, scoped, tag = 'input window, operand 1']
    #allocation5 [shape = 's32[2]{0}', space=sflag, size = 0x8, scoped, tag = 'scoped memory for tpu_custom_call.1']
    %7 = vsyncpa [#allocation3], 0
    %s8 = scalar_lea.sflag [#allocation3], 1
    %9 = vsyncpa %s8, 0
    %10 = vsyncpa [#allocation5], 0
    %s11 = scalar_lea.sflag [#allocation5], 1
    %12 = vsyncpa %s11, 0
    loop: start=0, step=1, limit=4
    $region2: #{tpu_custom_call.1} parent=1 // loop_pre_header
      _
    $region3: #{tpu_custom_call.1} parent=1 // loop_header
      %s14 = sphi 0, %s18
      %p15 = scmp.ge.s32.totalorder %s14, 4
      %s24 = sphi 0, %s26
      %s27 = sphi 0, %s24
      %s28 = sphi 0, %s27
      %s44 = sphi 0, %s28
      %s50 = sphi 0, %s52
      %s53 = sphi 0, %s50
      %s54 = sphi 0, %s53
      %s70 = sphi 0, %s54
      %s76 = sphi 0, %s78
      %s79 = sphi 0, %s76
      %s80 = sphi 0, %s79
      %s96 = sphi 0, %s80
    $region4: #{tpu_custom_call.1} parent=1 // loop_header_branch
      %17 = sbr.rel (%p15) target = $region8
    $region5: #{tpu_custom_call.1} parent=1 // loop_body
      %s19 = ssub.s32 %s14, 1
      %s20 = ssub.s32 %s14, 2
      %s21 = sadd.s32 %s14, 1
      %s22 = ssub.s32 %s14, %s21
      %p23 = scmp.eq.s32.totalorder %s22, 0
      %s25 = sadd.s32 %s24, 1
      %s26 = scalar_select %p23, %s24, %s25
      %p29 = pneg %p23
      %p30 = scmp.eq.s32.totalorder %s14, 1
      %p31 = por %p29, %p30
      %p32 = scmp.ne.s32.totalorder %s24, %s27
      %p33 = scmp.eq.s32.totalorder %s14, 0
      %p34 = por %p32, %p33
      %p35 = scmp.ne.s32.totalorder %s24, %s27
      %p36 = scmp.eq.s32.totalorder %s19, 1
      %p37 = por %p35, %p36
      %p38 = scmp.ne.s32.totalorder %s27, %s28
      %p39 = scmp.eq.s32.totalorder %s19, 0
      %p40 = por %p38, %p39
      %p41 = scmp.ne.s32.totalorder %s27, %s28
      %p42 = scmp.eq.s32.totalorder %s20, 1
      %p43 = por %p41, %p42
      %p45 = scmp.ne.s32.totalorder %s28, %s44
      %p46 = scmp.eq.s32.totalorder %s20, 0
      %p47 = por %p45, %p46
      %s48 = ssub.s32 %s14, %s21
      %p49 = scmp.eq.s32.totalorder %s48, 0
      %s51 = sadd.s32 %s50, 1
      %s52 = scalar_select %p49, %s50, %s51
      %p55 = pneg %p49
      %p56 = scmp.eq.s32.totalorder %s14, 1
      %p57 = por %p55, %p56
      %p58 = scmp.ne.s32.totalorder %s50, %s53
      %p59 = scmp.eq.s32.totalorder %s14, 0
      %p60 = por %p58, %p59
      %p61 = scmp.ne.s32.totalorder %s50, %s53
      %p62 = scmp.eq.s32.totalorder %s19, 1
      %p63 = por %p61, %p62
      %p64 = scmp.ne.s32.totalorder %s53, %s54
      %p65 = scmp.eq.s32.totalorder %s19, 0
      %p66 = por %p64, %p65
      %p67 = scmp.ne.s32.totalorder %s53, %s54
      %p68 = scmp.eq.s32.totalorder %s20, 1
      %p69 = por %p67, %p68
      %p71 = scmp.ne.s32.totalorder %s54, %s70
      %p72 = scmp.eq.s32.totalorder %s20, 0
      %p73 = por %p71, %p72
      %s74 = ssub.s32 %s14, %s21
      %p75 = scmp.eq.s32.totalorder %s74, 0
      %s77 = sadd.s32 %s76, 1
      %s78 = scalar_select %p75, %s76, %s77
      %p81 = pneg %p75
      %p82 = scmp.eq.s32.totalorder %s14, 1
      %p83 = por %p81, %p82
      %p84 = scmp.ne.s32.totalorder %s76, %s79
      %p85 = scmp.eq.s32.totalorder %s14, 0
      %p86 = por %p84, %p85
      %p87 = scmp.ne.s32.totalorder %s76, %s79
      %p88 = scmp.eq.s32.totalorder %s19, 1
      %p89 = por %p87, %p88
      %p90 = scmp.ne.s32.totalorder %s79, %s80
      %p91 = scmp.eq.s32.totalorder %s19, 0
      %p92 = por %p90, %p91
      %p93 = scmp.ne.s32.totalorder %s79, %s80
      %p94 = scmp.eq.s32.totalorder %s20, 1
      %p95 = por %p93, %p94
      %p97 = scmp.ne.s32.totalorder %s80, %s96
      %p98 = scmp.eq.s32.totalorder %s20, 0
      %p99 = por %p97, %p98
      %p100 = scmp.le.s32.totalorder 1, %s14
      %p101 = scmp.lt.s32.totalorder %s14, 3
      %p102 = pnand %p100, %p101
      %p103 = pneg %p102
      // Predicated region
      $region9: #{tpu_custom_call.1} parent=5 // pred_check
        _
      $region10: #{tpu_custom_call.1} parent=5 // pred_check_branch
        %105 = sbr.rel (%p102) target = $region12
      $region11: #{tpu_custom_call.1} parent=5 // pred_region
        %s106 = ssub.s32 %s14, 1
      $region12: #{tpu_custom_call.1} parent=5 // pred_fallthru
        _
      %p107 = scmp.lt.s32.totalorder %s14, 2
      // Predicated region
      $region13: #{tpu_custom_call.1} parent=5 // pred_check
        %p108 = pneg %p107
      $region14: #{tpu_custom_call.1} parent=5 // pred_check_branch
        %110 = sbr.rel (%p108) target = $region16
      $region15: #{tpu_custom_call.1} parent=5 // pred_region
        // Predicated region
        $region17: #{tpu_custom_call.1} parent=15 // pred_check
          %p111 = pneg %p34
        $region18: #{tpu_custom_call.1} parent=15 // pred_check_branch
          %113 = sbr.rel (%p111) target = $region20
        $region19: #{tpu_custom_call.1} parent=15 // pred_region
          %s114 = sand.u32 %s24, 1
          %s115 = scalar_lea.sflag [#allocation3], %s114
          %s116 = sand.u32 %s24, 1
          %s117 = smul.addr %s116, 16
          %s118 = scalar_lea.vmem [#allocation2], %s117
          %120 = vsyncadd %s115, 0
          %s121 = smul.addr %s14, 2
          %s122 = smul.addr %s121, 8
          %s123 = scalar_lea.hbm %s0, %s122
          %s124 = sshll.u32 %s123, 4
          %s125 = int_to_ptr.hbm [resolvable:$true] %s124
          %s126 = sshll.u32 %s118, 4
          %s127 = int_to_ptr.vmem [resolvable:$true] %s126
          %132 = dma.hbm_to_vmem [thread:$0]  %s125, 256, %s127, %s115, 128, 128, 8
        $region20: #{tpu_custom_call.1} parent=15 // pred_fallthru
          _
        // Predicated region
        $region21: #{tpu_custom_call.1} parent=15 // pred_check
          %p133 = pneg %p60
        $region22: #{tpu_custom_call.1} parent=15 // pred_check_branch
          %135 = sbr.rel (%p133) target = $region24
        $region23: #{tpu_custom_call.1} parent=15 // pred_region
          %s136 = sand.u32 %s50, 1
          %s137 = scalar_lea.sflag [#allocation5], %s136
          %s138 = sand.u32 %s50, 1
          %s139 = smul.addr %s138, 16
          %s140 = scalar_lea.vmem [#allocation4], %s139
          %142 = vsyncadd %s137, 0
          %s143 = smul.addr %s14, 2
          %s144 = smul.addr %s143, 8
          %s145 = scalar_lea.hbm %s1, %s144
          %s146 = sshll.u32 %s145, 4
          %s147 = int_to_ptr.hbm [resolvable:$true] %s146
          %s148 = sshll.u32 %s140, 4
          %s149 = int_to_ptr.vmem [resolvable:$true] %s148
          %154 = dma.hbm_to_vmem [thread:$0]  %s147, 256, %s149, %s137, 128, 128, 8
        $region24: #{tpu_custom_call.1} parent=15 // pred_fallthru
          _
      $region16: #{tpu_custom_call.1} parent=5 // pred_fallthru
        _
      %p155 = scmp.le.s32.totalorder 1, %s14
      %p156 = scmp.lt.s32.totalorder %s14, 3
      %p157 = pnand %p155, %p156
      %p158 = pneg %p157
      // Predicated region
      $region25: #{tpu_custom_call.1} parent=5 // pred_check
        _
      $region26: #{tpu_custom_call.1} parent=5 // pred_check_branch
        %160 = sbr.rel (%p157) target = $region28
      $region27: #{tpu_custom_call.1} parent=5 // pred_region
        %s161 = ssub.s32 %s14, 1
        %s162 = sand.u32 %s27, 1
        %s163 = scalar_lea.sflag [#allocation3], %s162
        %s164 = sand.u32 %s27, 1
        %s165 = smul.addr %s164, 16
        %s166 = scalar_lea.vmem [#allocation2], %s165
        // Predicated region
        $region29: #{tpu_custom_call.1} parent=27 // pred_check
          %p167 = pneg %p40
        $region30: #{tpu_custom_call.1} parent=27 // pred_check_branch
          %169 = sbr.rel (%p167) target = $region32
        $region31: #{tpu_custom_call.1} parent=27 // pred_region
          %171 = dma.done %s163, 256
        $region32: #{tpu_custom_call.1} parent=27 // pred_fallthru
          _
        %s172 = sand.u32 %s53, 1
        %s173 = scalar_lea.sflag [#allocation5], %s172
        %s174 = sand.u32 %s53, 1
        %s175 = smul.addr %s174, 16
        %s176 = scalar_lea.vmem [#allocation4], %s175
        // Predicated region
        $region33: #{tpu_custom_call.1} parent=27 // pred_check
          %p177 = pneg %p66
        $region34: #{tpu_custom_call.1} parent=27 // pred_check_branch
          %179 = sbr.rel (%p177) target = $region36
        $region35: #{tpu_custom_call.1} parent=27 // pred_region
          %181 = dma.done %s173, 256
        $region36: #{tpu_custom_call.1} parent=27 // pred_fallthru
          _
        %s182 = sand.u32 %s27, 1
        %s183 = scalar_lea.sflag [#allocation3], %s182
        %s184 = sand.u32 %s27, 1
        %s185 = smul.addr %s184, 16
        %s186 = scalar_lea.vmem [#allocation2], %s185
        %p187 = pneg %p40
        %p188 = pneg %p37
        %s189 = sand.u32 %s53, 1
        %s190 = scalar_lea.sflag [#allocation5], %s189
        %s191 = sand.u32 %s53, 1
        %s192 = smul.addr %s191, 16
        %s193 = scalar_lea.vmem [#allocation4], %s192
        %p194 = pneg %p66
        %p195 = pneg %p63
        %p196 = pneg %p92
        %p197 = pneg %p89
        %p198 = scmp.lt.s32.totalorder %s19, 1
        %s199 = scalar_select %p198, %s19, 1
        %s200 = scalar_lea.vmem %s2, %s199
        %p201 = scmp.lt.s32.totalorder %s19, 1
        %s202 = scalar_select %p201, %s19, 1
        %s203 = scalar_lea.vmem %s2, %s202
        %v204 = vld [vmem:[%s176] sm:$0xff]
        %v205 = vld [vmem:[%s176 + $0x8] sm:$0xff]
        %vm206 = vcmp.gt.f32.partialorder %v204, 0.5
        %vm207 = vcmp.gt.f32.partialorder %v205, 0.5
        %v208 = vsel %vm206, 1, 0
        %v209 = vsel %vm207, 1, 0
        %v210 = vcvt.s32.f32 %v208
        %v211 = vcvt.s32.f32 %v209
        %v212 = vlaneseq
        %v213 = vshrl.u32 %v212, 7
        %v214 = vadd.s32 %v213, 8
        %v215 = vlaneseq
        %v216 = vand.u32 %v215, 127
        %vm217 = vcmp.lt.s32.totalorder %v213, 15
        %vm218 = vcmp.lt.s32.totalorder %v214, 15
        %vm219 = vcmp.ge.s32.totalorder %v213, 1
        %vm220 = vcmp.ge.s32.totalorder %v214, 1
        %vm221 = vcmp.lt.s32.totalorder %v216, 15
        %vm222 = vcmp.ge.s32.totalorder %v216, 1
        %v223 = vrot.slane %v210, 1
        %v224 = vrot.slane %v211, 1
        %vm225 = vcmp.lt.s32.totalorder %v213, 7
        %v226 = vsel %vm225, %v223, %v224
        %v227 = vsel %vm225, %v224, %v223
        %v228 = vrot.slane %v210, 7
        %v229 = vrot.slane %v211, 7
        %vm230 = vcmp.lt.s32.totalorder %v213, 1
        %v231 = vsel %vm230, %v228, %v229
        %v232 = vsel %vm230, %v229, %v228
        %v233 = vsel %vm217, 1, 0
        %v234 = vsel %vm218, 1, 0
        %vm235 = vcmp.eq.s32.totalorder %v233, 1
        %vm236 = vcmp.eq.s32.totalorder %v234, 1
        %v237 = vsel %vm235, %v226, 0.0
        %v238 = vsel %vm236, %v227, 0.0
        %v239 = vsel %vm219, 1, 0
        %v240 = vsel %vm220, 1, 0
        %vm241 = vcmp.eq.s32.totalorder %v239, 1
        %vm242 = vcmp.eq.s32.totalorder %v240, 1
        %v243 = vsel %vm241, %v232, 0.0
        %v244 = vsel %vm242, %v231, 0.0
        %v245 = vmax.f32 %v237, %v243
        %v246 = vmax.f32 %v238, %v244
        %v247 = vmax.f32 %v210, %v245
        %v248 = vmax.f32 %v211, %v246
        %v249 = vsel %vm235, %v226, 1.0
        %v250 = vsel %vm236, %v227, 1.0
        %v251 = vsel %vm241, %v232, 1.0
        %v252 = vsel %vm242, %v231, 1.0
        %v253 = vmin.f32 %v249, %v251
        %v254 = vmin.f32 %v250, %v252
        %v255 = vmin.f32 %v210, %v253
        %v256 = vmin.f32 %v211, %v254
        %vm257 = vcmask 1047680
        %258 = vrot.lane.b32.xlu0 %v247, 16
        %v259 = vpop.permute.xlu0 %258
        %v260 = vsel %vm257, %v259, %v247
        %261 = vrot.lane.b32.xlu0 %v248, 16
        %v262 = vpop.permute.xlu0 %261
        %v263 = vsel %vm257, %v262, %v248
        %264 = vrot.lane.b32.xlu0 %v260, 16
        %v265 = vpop.permute.xlu0 %264
        %266 = vrot.lane.b32.xlu0 %v263, 16
        %v267 = vpop.permute.xlu0 %266
        %v268 = vsel %vm257, %v265, %v247
        %v269 = vsel %vm257, %v267, %v248
        %v270 = vsel %vm221, 1, 0
        %vm271 = vcmp.eq.s32.totalorder %v270, 1
        %274 = vrot.lane.b32.xlu0 %v268, 127
        %v275 = vpop.permute.xlu0 %274
        %276 = vrot.lane.b32.xlu0 %v269, 127
        %v277 = vpop.permute.xlu0 %276
        %v280 = vsel %vm271, %v275, 0.0
        %v281 = vsel %vm271, %v277, 0.0
        %v282 = vsel %vm222, 1, 0
        %vm283 = vcmp.eq.s32.totalorder %v282, 1
        %284 = vrot.lane.b32.xlu0 %v268, 113
        %v285 = vpop.permute.xlu0 %284
        %286 = vrot.lane.b32.xlu0 %v269, 113
        %v287 = vpop.permute.xlu0 %286
        %v290 = vsel %vm283, %v285, 0.0
        %v291 = vsel %vm283, %v287, 0.0
        %v292 = vmax.f32 %v280, %v290
        %v293 = vmax.f32 %v281, %v291
        %v294 = vmax.f32 %v247, %v292
        %v295 = vmax.f32 %v248, %v293
        %296 = vrot.lane.b32.xlu0 %v255, 16
        %v297 = vpop.permute.xlu0 %296
        %v298 = vsel %vm257, %v297, %v255
        %299 = vrot.lane.b32.xlu0 %v256, 16
        %v300 = vpop.permute.xlu0 %299
        %v301 = vsel %vm257, %v300, %v256
        %302 = vrot.lane.b32.xlu0 %v298, 16
        %v303 = vpop.permute.xlu0 %302
        %304 = vrot.lane.b32.xlu0 %v301, 16
        %v305 = vpop.permute.xlu0 %304
        %v306 = vsel %vm257, %v303, %v255
        %v307 = vsel %vm257, %v305, %v256
        %310 = vrot.lane.b32.xlu0 %v306, 127
        %v311 = vpop.permute.xlu0 %310
        %312 = vrot.lane.b32.xlu0 %v307, 127
        %v313 = vpop.permute.xlu0 %312
        %v316 = vsel %vm271, %v311, 1.0
        %v317 = vsel %vm271, %v313, 1.0
        %318 = vrot.lane.b32.xlu0 %v306, 113
        %v319 = vpop.permute.xlu0 %318
        %320 = vrot.lane.b32.xlu0 %v307, 113
        %v321 = vpop.permute.xlu0 %320
        %v324 = vsel %vm283, %v319, 1.0
        %v325 = vsel %vm283, %v321, 1.0
        %v326 = vmin.f32 %v316, %v324
        %v327 = vmin.f32 %v317, %v325
        %v328 = vmin.f32 %v255, %v326
        %v329 = vmin.f32 %v256, %v327
        %v330 = vsub.f32 %v294, %v328
        %v331 = vsub.f32 %v295, %v329
        %vm332 = vcmask 130048
        %v333 = vsel %vm332, %v210, -inf
        %v334 = vsel %vm332, %v211, -inf
        %v335 = vmax.f32 %v333, %v334
        %336 = vmax.xlane.f32.xlu0 %v335
        %v337 = vpop.xlane.xlu0 %336
        %v338 = vrot.slane %v337, 4
        %v339 = vmax.f32 %v337, %v338
        %v340 = vrot.slane %v339, 2
        %v341 = vmax.f32 %v339, %v340
        %v342 = vrot.slane %v341, 1
        %v343 = vmax.f32 %v341, %v342
        %s344 = vtos %v343
        %p345 = scmp.gt.f32.partialorder %s344, 0.0
        %v346 = vsel %vm332, %v330, -inf
        %v347 = vsel %vm332, %v331, -inf
        %v348 = vmax.f32 %v346, %v347
        %349 = vmax.xlane.f32.xlu0 %v348
        %v350 = vpop.xlane.xlu0 %349
        %v351 = vrot.slane %v350, 4
        %v352 = vmax.f32 %v350, %v351
        %v353 = vrot.slane %v352, 2
        %v354 = vmax.f32 %v352, %v353
        %v355 = vrot.slane %v354, 1
        %v356 = vmax.f32 %v354, %v355
        %s357 = vtos %v356
        %p358 = scmp.gt.f32.partialorder %s357, 0.0
        %s359 = scalar_select %p358, 1, 0
        %v360 = vstv %s359
        %vm361 = vcmp.eq.s32.totalorder %v360, 1
        %v362 = vsel %vm361, %v330, %v210
        %v363 = vsel %vm361, %v331, %v211
        %vm364 = vcmp.gt.f32.partialorder %v362, 0.0
        %vm365 = vcmp.gt.f32.partialorder %v363, 0.0
        %v366 = vsel %vm364, 0.0, 1000000.0
        %v367 = vsel %vm365, 0.0, 1000000.0
        %v368 = vrot.slane %v366, 1
        %v369 = vrot.slane %v367, 1
        %v370 = vsel %vm225, %v368, %v369
        %v371 = vsel %vm225, %v369, %v368
        %v372 = vrot.slane %v366, 7
        %v373 = vrot.slane %v367, 7
        %v374 = vsel %vm230, %v372, %v373
        %v375 = vsel %vm230, %v373, %v372
        %v376 = vsel %vm235, %v370, 1000000.0
        %v377 = vsel %vm236, %v371, 1000000.0
        %v378 = vsel %vm241, %v375, 1000000.0
        %v379 = vsel %vm242, %v374, 1000000.0
        %380 = vrot.lane.b32.xlu0 %v366, 16
        %v381 = vpop.permute.xlu0 %380
        %v382 = vsel %vm257, %v381, %v366
        %383 = vrot.lane.b32.xlu0 %v367, 16
        %v384 = vpop.permute.xlu0 %383
        %v385 = vsel %vm257, %v384, %v367
        %386 = vrot.lane.b32.xlu0 %v382, 16
        %v387 = vpop.permute.xlu0 %386
        %388 = vrot.lane.b32.xlu0 %v385, 16
        %v389 = vpop.permute.xlu0 %388
        %v390 = vsel %vm257, %v387, %v366
        %v391 = vsel %vm257, %v389, %v367
        %394 = vrot.lane.b32.xlu0 %v390, 127
        %v395 = vpop.permute.xlu0 %394
        %396 = vrot.lane.b32.xlu0 %v391, 127
        %v397 = vpop.permute.xlu0 %396
        %v400 = vsel %vm271, %v395, 1000000.0
        %v401 = vsel %vm271, %v397, 1000000.0
        %402 = vrot.lane.b32.xlu0 %v390, 113
        %v403 = vpop.permute.xlu0 %402
        %404 = vrot.lane.b32.xlu0 %v391, 113
        %v405 = vpop.permute.xlu0 %404
        %v408 = vsel %vm283, %v403, 1000000.0
        %v409 = vsel %vm283, %v405, 1000000.0
        %v410 = vmin.f32 %v376, %v378
        %v411 = vmin.f32 %v377, %v379
        %v412 = vmin.f32 %v400, %v408
        %v413 = vmin.f32 %v401, %v409
        %v414 = vmin.f32 %v410, %v412
        %v415 = vmin.f32 %v411, %v413
        %v416 = vadd.f32 %v414, 0.955
        %v417 = vadd.f32 %v415, 0.955
        %v418 = vmin.f32 %v366, %v416
        %v419 = vmin.f32 %v367, %v417
        %v420 = vrot.slane %v418, 1
        %v421 = vrot.slane %v419, 1
        %v422 = vsel %vm225, %v420, %v421
        %v423 = vsel %vm225, %v421, %v420
        %v424 = vrot.slane %v418, 7
        %v425 = vrot.slane %v419, 7
        %v426 = vsel %vm230, %v424, %v425
        %v427 = vsel %vm230, %v425, %v424
        %v428 = vsel %vm235, %v422, 1000000.0
        %v429 = vsel %vm236, %v423, 1000000.0
        %v430 = vsel %vm241, %v427, 1000000.0
        %v431 = vsel %vm242, %v426, 1000000.0
        %v432 = vmin.f32 %v428, %v430
        %v433 = vmin.f32 %v429, %v431
        %434 = vrot.lane.b32.xlu0 %v432, 16
        %v435 = vpop.permute.xlu0 %434
        %v436 = vsel %vm257, %v435, %v432
        %437 = vrot.lane.b32.xlu0 %v433, 16
        %v438 = vpop.permute.xlu0 %437
        %v439 = vsel %vm257, %v438, %v433
        %440 = vrot.lane.b32.xlu0 %v436, 16
        %v441 = vpop.permute.xlu0 %440
        %442 = vrot.lane.b32.xlu0 %v439, 16
        %v443 = vpop.permute.xlu0 %442
        %v444 = vsel %vm257, %v441, %v432
        %v445 = vsel %vm257, %v443, %v433
        %448 = vrot.lane.b32.xlu0 %v444, 127
        %v449 = vpop.permute.xlu0 %448
        %450 = vrot.lane.b32.xlu0 %v445, 127
        %v451 = vpop.permute.xlu0 %450
        %v454 = vsel %vm271, %v449, 1000000.0
        %v455 = vsel %vm271, %v451, 1000000.0
        %456 = vrot.lane.b32.xlu0 %v444, 113
        %v457 = vpop.permute.xlu0 %456
        %458 = vrot.lane.b32.xlu0 %v445, 113
        %v459 = vpop.permute.xlu0 %458
        %v462 = vsel %vm283, %v457, 1000000.0
        %v463 = vsel %vm283, %v459, 1000000.0
        %v464 = vmin.f32 %v454, %v462
        %v465 = vmin.f32 %v455, %v463
        %v466 = vadd.f32 %v464, 1.3693
        %v467 = vadd.f32 %v465, 1.3693
        %v468 = vmin.f32 %v418, %v466
        %v469 = vmin.f32 %v419, %v467
        %vm470 = vcmp.lt.s32.totalorder %v213, 14
        %vm471 = vcmp.lt.s32.totalorder %v214, 14
        %vm472 = vcmp.ge.s32.totalorder %v213, 2
        %vm473 = vcmp.ge.s32.totalorder %v214, 2
        %vm474 = vcmp.lt.s32.totalorder %v216, 14
        %vm475 = vcmp.ge.s32.totalorder %v216, 2
        %v476 = vrot.slane %v468, 2
        %v477 = vrot.slane %v469, 2
        %vm478 = vcmp.lt.s32.totalorder %v213, 6
        %v479 = vsel %vm478, %v476, %v477
        %v480 = vsel %vm478, %v477, %v476
        %v481 = vrot.slane %v468, 6
        %v482 = vrot.slane %v469, 6
        %vm483 = vcmp.lt.s32.totalorder %v213, 2
        %v484 = vsel %vm483, %v481, %v482
        %v485 = vsel %vm483, %v482, %v481
        %v486 = vsel %vm470, 1, 0
        %v487 = vsel %vm471, 1, 0
        %vm488 = vcmp.eq.s32.totalorder %v486, 1
        %vm489 = vcmp.eq.s32.totalorder %v487, 1
        %v490 = vsel %vm488, %v479, 1000000.0
        %v491 = vsel %vm489, %v480, 1000000.0
        %v492 = vsel %vm472, 1, 0
        %v493 = vsel %vm473, 1, 0
        %vm494 = vcmp.eq.s32.totalorder %v492, 1
        %vm495 = vcmp.eq.s32.totalorder %v493, 1
        %v496 = vsel %vm494, %v485, 1000000.0
        %v497 = vsel %vm495, %v484, 1000000.0
        %498 = vrot.lane.b32.xlu0 %v468, 16
        %v499 = vpop.permute.xlu0 %498
        %v500 = vsel %vm257, %v499, %v468
        %501 = vrot.lane.b32.xlu0 %v469, 16
        %v502 = vpop.permute.xlu0 %501
        %v503 = vsel %vm257, %v502, %v469
        %504 = vrot.lane.b32.xlu0 %v500, 16
        %v505 = vpop.permute.xlu0 %504
        %506 = vrot.lane.b32.xlu0 %v503, 16
        %v507 = vpop.permute.xlu0 %506
        %v508 = vsel %vm257, %v505, %v468
        %v509 = vsel %vm257, %v507, %v469
        %v510 = vsel %vm474, 1, 0
        %vm511 = vcmp.eq.s32.totalorder %v510, 1
        %514 = vrot.lane.b32.xlu0 %v508, 126
        %v515 = vpop.permute.xlu0 %514
        %516 = vrot.lane.b32.xlu0 %v509, 126
        %v517 = vpop.permute.xlu0 %516
        %v520 = vsel %vm511, %v515, 1000000.0
        %v521 = vsel %vm511, %v517, 1000000.0
        %v522 = vsel %vm475, 1, 0
        %vm523 = vcmp.eq.s32.totalorder %v522, 1
        %524 = vrot.lane.b32.xlu0 %v508, 114
        %v525 = vpop.permute.xlu0 %524
        %526 = vrot.lane.b32.xlu0 %v509, 114
        %v527 = vpop.permute.xlu0 %526
        %v530 = vsel %vm523, %v525, 1000000.0
        %v531 = vsel %vm523, %v527, 1000000.0
        %v532 = vmin.f32 %v490, %v496
        %v533 = vmin.f32 %v491, %v497
        %v534 = vmin.f32 %v520, %v530
        %v535 = vmin.f32 %v521, %v531
        %v536 = vmin.f32 %v532, %v534
        %v537 = vmin.f32 %v533, %v535
        %v538 = vadd.f32 %v536, 1.91
        %v539 = vadd.f32 %v537, 1.91
        %v540 = vmin.f32 %v468, %v538
        %v541 = vmin.f32 %v469, %v539
        %v542 = vrot.slane %v540, 2
        %v543 = vrot.slane %v541, 2
        %v544 = vsel %vm478, %v542, %v543
        %v545 = vsel %vm478, %v543, %v542
        %v546 = vrot.slane %v540, 6
        %v547 = vrot.slane %v541, 6
        %v548 = vsel %vm483, %v546, %v547
        %v549 = vsel %vm483, %v547, %v546
        %v550 = vsel %vm488, %v544, 1000000.0
        %v551 = vsel %vm489, %v545, 1000000.0
        %v552 = vsel %vm494, %v549, 1000000.0
        %v553 = vsel %vm495, %v548, 1000000.0
        %v554 = vmin.f32 %v550, %v552
        %v555 = vmin.f32 %v551, %v553
        %556 = vrot.lane.b32.xlu0 %v554, 16
        %v557 = vpop.permute.xlu0 %556
        %v558 = vsel %vm257, %v557, %v554
        %559 = vrot.lane.b32.xlu0 %v555, 16
        %v560 = vpop.permute.xlu0 %559
        %v561 = vsel %vm257, %v560, %v555
        %562 = vrot.lane.b32.xlu0 %v558, 16
        %v563 = vpop.permute.xlu0 %562
        %564 = vrot.lane.b32.xlu0 %v561, 16
        %v565 = vpop.permute.xlu0 %564
        %v566 = vsel %vm257, %v563, %v554
        %v567 = vsel %vm257, %v565, %v555
        %570 = vrot.lane.b32.xlu0 %v566, 126
        %v571 = vpop.permute.xlu0 %570
        %572 = vrot.lane.b32.xlu0 %v567, 126
        %v573 = vpop.permute.xlu0 %572
        %v576 = vsel %vm511, %v571, 1000000.0
        %v577 = vsel %vm511, %v573, 1000000.0
        %578 = vrot.lane.b32.xlu0 %v566, 114
        %v579 = vpop.permute.xlu0 %578
        %580 = vrot.lane.b32.xlu0 %v567, 114
        %v581 = vpop.permute.xlu0 %580
        %v584 = vsel %vm523, %v579, 1000000.0
        %v585 = vsel %vm523, %v581, 1000000.0
        %v586 = vmin.f32 %v576, %v584
        %v587 = vmin.f32 %v577, %v585
        %v588 = vadd.f32 %v586, 2.7386
        %v589 = vadd.f32 %v587, 2.7386
        %v590 = vmin.f32 %v540, %v588
        %v591 = vmin.f32 %v541, %v589
        %vm592 = vcmp.lt.s32.totalorder %v213, 12
        %vm593 = vcmp.lt.s32.totalorder %v214, 12
        %vm594 = vcmp.ge.s32.totalorder %v213, 4
        %vm595 = vcmp.ge.s32.totalorder %v214, 4
        %vm596 = vcmp.lt.s32.totalorder %v216, 12
        %vm597 = vcmp.ge.s32.totalorder %v216, 4
        %v598 = vrot.slane %v590, 4
        %v599 = vrot.slane %v591, 4
        %vm600 = vcmp.lt.s32.totalorder %v213, 4
        %v601 = vsel %vm600, %v598, %v599
        %v602 = vsel %vm600, %v599, %v598
        %v603 = vsel %vm592, 1, 0
        %v604 = vsel %vm593, 1, 0
        %vm605 = vcmp.eq.s32.totalorder %v603, 1
        %vm606 = vcmp.eq.s32.totalorder %v604, 1
        %v607 = vsel %vm605, %v601, 1000000.0
        %v608 = vsel %vm606, %v602, 1000000.0
        %v609 = vsel %vm594, 1, 0
        %v610 = vsel %vm595, 1, 0
        %vm611 = vcmp.eq.s32.totalorder %v609, 1
        %vm612 = vcmp.eq.s32.totalorder %v610, 1
        %v613 = vsel %vm611, %v602, 1000000.0
        %v614 = vsel %vm612, %v601, 1000000.0
        %615 = vrot.lane.b32.xlu0 %v590, 16
        %v616 = vpop.permute.xlu0 %615
        %v617 = vsel %vm257, %v616, %v590
        %618 = vrot.lane.b32.xlu0 %v591, 16
        %v619 = vpop.permute.xlu0 %618
        %v620 = vsel %vm257, %v619, %v591
        %621 = vrot.lane.b32.xlu0 %v617, 16
        %v622 = vpop.permute.xlu0 %621
        %623 = vrot.lane.b32.xlu0 %v620, 16
        %v624 = vpop.permute.xlu0 %623
        %v625 = vsel %vm257, %v622, %v590
        %v626 = vsel %vm257, %v624, %v591
        %v627 = vsel %vm596, 1, 0
        %vm628 = vcmp.eq.s32.totalorder %v627, 1
        %631 = vrot.lane.b32.xlu0 %v625, 124
        %v632 = vpop.permute.xlu0 %631
        %633 = vrot.lane.b32.xlu0 %v626, 124
        %v634 = vpop.permute.xlu0 %633
        %v637 = vsel %vm628, %v632, 1000000.0
        %v638 = vsel %vm628, %v634, 1000000.0
        %v639 = vsel %vm597, 1, 0
        %vm640 = vcmp.eq.s32.totalorder %v639, 1
        %641 = vrot.lane.b32.xlu0 %v625, 116
        %v642 = vpop.permute.xlu0 %641
        %643 = vrot.lane.b32.xlu0 %v626, 116
        %v644 = vpop.permute.xlu0 %643
        %v647 = vsel %vm640, %v642, 1000000.0
        %v648 = vsel %vm640, %v644, 1000000.0
        %v649 = vmin.f32 %v607, %v613
        %v650 = vmin.f32 %v608, %v614
        %v651 = vmin.f32 %v637, %v647
        %v652 = vmin.f32 %v638, %v648
        %v653 = vmin.f32 %v649, %v651
        %v654 = vmin.f32 %v650, %v652
        %v655 = vadd.f32 %v653, 3.82
        %v656 = vadd.f32 %v654, 3.82
        %v657 = vmin.f32 %v590, %v655
        %v658 = vmin.f32 %v591, %v656
        %v659 = vrot.slane %v657, 4
        %v660 = vrot.slane %v658, 4
        %v661 = vsel %vm600, %v659, %v660
        %v662 = vsel %vm600, %v660, %v659
        %v663 = vsel %vm605, %v661, 1000000.0
        %v664 = vsel %vm606, %v662, 1000000.0
        %v665 = vsel %vm611, %v662, 1000000.0
        %v666 = vsel %vm612, %v661, 1000000.0
        %v667 = vmin.f32 %v663, %v665
        %v668 = vmin.f32 %v664, %v666
        %669 = vrot.lane.b32.xlu0 %v667, 16
        %v670 = vpop.permute.xlu0 %669
        %v671 = vsel %vm257, %v670, %v667
        %672 = vrot.lane.b32.xlu0 %v668, 16
        %v673 = vpop.permute.xlu0 %672
        %v674 = vsel %vm257, %v673, %v668
        %675 = vrot.lane.b32.xlu0 %v671, 16
        %v676 = vpop.permute.xlu0 %675
        %677 = vrot.lane.b32.xlu0 %v674, 16
        %v678 = vpop.permute.xlu0 %677
        %v679 = vsel %vm257, %v676, %v667
        %v680 = vsel %vm257, %v678, %v668
        %683 = vrot.lane.b32.xlu0 %v679, 124
        %v684 = vpop.permute.xlu0 %683
        %685 = vrot.lane.b32.xlu0 %v680, 124
        %v686 = vpop.permute.xlu0 %685
        %v689 = vsel %vm628, %v684, 1000000.0
        %v690 = vsel %vm628, %v686, 1000000.0
        %691 = vrot.lane.b32.xlu0 %v679, 116
        %v692 = vpop.permute.xlu0 %691
        %693 = vrot.lane.b32.xlu0 %v680, 116
        %v694 = vpop.permute.xlu0 %693
        %v697 = vsel %vm640, %v692, 1000000.0
        %v698 = vsel %vm640, %v694, 1000000.0
        %v699 = vmin.f32 %v689, %v697
        %v700 = vmin.f32 %v690, %v698
        %v701 = vadd.f32 %v699, 5.4772
        %v702 = vadd.f32 %v700, 5.4772
        %v703 = vmin.f32 %v657, %v701
        %v704 = vmin.f32 %v658, %v702
        %vm705 = vcmp.lt.s32.totalorder %v213, 8
        %vm706 = vcmp.lt.s32.totalorder %v214, 8
        %vm707 = vcmp.ge.s32.totalorder %v213, 8
        %vm708 = vcmp.ge.s32.totalorder %v214, 8
        %vm709 = vcmp.lt.s32.totalorder %v216, 8
        %vm710 = vcmp.ge.s32.totalorder %v216, 8
        %v711 = vsel %vm705, 1, 0
        %v712 = vsel %vm706, 1, 0
        %vm713 = vcmp.eq.s32.totalorder %v711, 1
        %vm714 = vcmp.eq.s32.totalorder %v712, 1
        %v715 = vsel %vm713, %v704, 1000000.0
        %v716 = vsel %vm714, %v703, 1000000.0
        %v717 = vsel %vm707, 1, 0
        %v718 = vsel %vm708, 1, 0
        %vm719 = vcmp.eq.s32.totalorder %v717, 1
        %vm720 = vcmp.eq.s32.totalorder %v718, 1
        %v721 = vsel %vm719, %v704, 1000000.0
        %v722 = vsel %vm720, %v703, 1000000.0
        %723 = vrot.lane.b32.xlu0 %v703, 16
        %v724 = vpop.permute.xlu0 %723
        %v725 = vsel %vm257, %v724, %v703
        %726 = vrot.lane.b32.xlu0 %v704, 16
        %v727 = vpop.permute.xlu0 %726
        %v728 = vsel %vm257, %v727, %v704
        %729 = vrot.lane.b32.xlu0 %v725, 16
        %v730 = vpop.permute.xlu0 %729
        %731 = vrot.lane.b32.xlu0 %v728, 16
        %v732 = vpop.permute.xlu0 %731
        %v733 = vsel %vm257, %v730, %v703
        %v734 = vsel %vm257, %v732, %v704
        %v735 = vsel %vm709, 1, 0
        %vm736 = vcmp.eq.s32.totalorder %v735, 1
        %739 = vrot.lane.b32.xlu0 %v733, 120
        %v740 = vpop.permute.xlu0 %739
        %741 = vrot.lane.b32.xlu0 %v734, 120
        %v742 = vpop.permute.xlu0 %741
        %v745 = vsel %vm736, %v740, 1000000.0
        %v746 = vsel %vm736, %v742, 1000000.0
        %v747 = vsel %vm710, 1, 0
        %vm748 = vcmp.eq.s32.totalorder %v747, 1
        %v749 = vsel %vm748, %v740, 1000000.0
        %v750 = vsel %vm748, %v742, 1000000.0
        %v751 = vmin.f32 %v715, %v721
        %v752 = vmin.f32 %v716, %v722
        %v753 = vmin.f32 %v745, %v749
        %v754 = vmin.f32 %v746, %v750
        %v755 = vmin.f32 %v751, %v753
        %v756 = vmin.f32 %v752, %v754
        %v757 = vadd.f32 %v755, 7.64
        %v758 = vadd.f32 %v756, 7.64
        %v759 = vmin.f32 %v703, %v757
        %v760 = vmin.f32 %v704, %v758
        %v761 = vsel %vm713, %v760, 1000000.0
        %v762 = vsel %vm714, %v759, 1000000.0
        %v763 = vsel %vm719, %v760, 1000000.0
        %v764 = vsel %vm720, %v759, 1000000.0
        %v765 = vmin.f32 %v761, %v763
        %v766 = vmin.f32 %v762, %v764
        %767 = vrot.lane.b32.xlu0 %v765, 16
        %v768 = vpop.permute.xlu0 %767
        %v769 = vsel %vm257, %v768, %v765
        %770 = vrot.lane.b32.xlu0 %v766, 16
        %v771 = vpop.permute.xlu0 %770
        %v772 = vsel %vm257, %v771, %v766
        %773 = vrot.lane.b32.xlu0 %v769, 16
        %v774 = vpop.permute.xlu0 %773
        %775 = vrot.lane.b32.xlu0 %v772, 16
        %v776 = vpop.permute.xlu0 %775
        %v777 = vsel %vm257, %v774, %v765
        %v778 = vsel %vm257, %v776, %v766
        %781 = vrot.lane.b32.xlu0 %v777, 120
        %v782 = vpop.permute.xlu0 %781
        %783 = vrot.lane.b32.xlu0 %v778, 120
        %v784 = vpop.permute.xlu0 %783
        %v787 = vsel %vm736, %v782, 1000000.0
        %v788 = vsel %vm736, %v784, 1000000.0
        %v789 = vsel %vm748, %v782, 1000000.0
        %v790 = vsel %vm748, %v784, 1000000.0
        %v791 = vmin.f32 %v787, %v789
        %v792 = vmin.f32 %v788, %v790
        %v793 = vadd.f32 %v791, 10.9544
        %v794 = vadd.f32 %v792, 10.9544
        %v795 = vmin.f32 %v759, %v793
        %v796 = vmin.f32 %v760, %v794
        %s797 = scalar_select %p345, 1, 0
        %v798 = vstv %s797
        %vm799 = vcmp.eq.s32.totalorder %v798, 1
        %v800 = vsel %vm799, %v795, 16.0
        %v801 = vsel %vm799, %v796, 16.0
        %v802 = vsel %vm332, %v800, -inf
        %v803 = vsel %vm332, %v801, -inf
        %v804 = vmax.f32 %v802, %v803
        %805 = vmax.xlane.f32.xlu0 %v804
        %v806 = vpop.xlane.xlu0 %805
        %v807 = vrot.slane %v806, 4
        %v808 = vmax.f32 %v806, %v807
        %v809 = vrot.slane %v808, 2
        %v810 = vmax.f32 %v808, %v809
        %v811 = vrot.slane %v810, 1
        %v812 = vmax.f32 %v810, %v811
        %s813 = vtos %v812
        %p814 = scmp.gt.f32.partialorder %s813, 0.0
        %v815 = vstv %s813
        %v816 = vrcp.pop %v815
        %v817 = vmul.f32 %v815, %v816
        %v818 = vsub.f32 1.0, %v817
        %v819 = vmul.f32 %v816, %v818
        %v820 = vadd.f32 %v816, %v819
        %vm821 = vweird.f32 %v815
        %vm822 = vweird.f32 %v816
        %vm823 = vmor %vm821, %vm822
        %v824 = vsel %vm823, %v816, %v820
        %v825 = vand.u32 2147483647, %v815
        %vm826 = vcmp.eq.f32.partialorder %v825, 8.507059e+37
        %v827 = vand.u32 %v815, 2147483648
        %v828 = vor.u32 1.1754944e-38, %v827
        %v829 = vsel %vm826, %v828, %v824
        %s830 = vtos %v829
        %s831 = scalar_select %p814, %s830, 1.0
        %v832 = vstv %s831
        %v833 = vmul.f32 %v800, %v832
        %v834 = vmul.f32 %v801, %v832
        %v835 = vadd.f32 %v833, 1.0
        %v836 = vadd.f32 %v834, 1.0
        %v837 = vld [vmem:[%s166] sm:$0xff]
        %v838 = vld [vmem:[%s166 + $0x8] sm:$0xff]
        %v839 = vxor.u32 %v837, 2147483648
        %v840 = vxor.u32 %v838, 2147483648
        %v841 = vmul.f32 %v839, 1.442695
        %v842 = vpow.pop %v841
        %v843 = vmul.f32 %v840, 1.442695
        %v844 = vpow.pop %v843
        %v845 = vadd.f32 %v842, 1.0
        %v846 = vadd.f32 %v844, 1.0
        %v847 = vrcp.pop %v845
        %v848 = vmul.f32 %v845, %v847
        %v849 = vsub.f32 1.0, %v848
        %v850 = vmul.f32 %v847, %v849
        %v851 = vadd.f32 %v847, %v850
        %vm852 = vweird.f32 %v845
        %vm853 = vweird.f32 %v847
        %vm854 = vmor %vm852, %vm853
        %v855 = vsel %vm854, %v847, %v851
        %v856 = vand.u32 2147483647, %v845
        %vm857 = vcmp.eq.f32.partialorder %v856, 8.507059e+37
        %v858 = vand.u32 %v845, 2147483648
        %v859 = vor.u32 1.1754944e-38, %v858
        %v860 = vsel %vm857, %v859, %v855
        %v861 = vmul.f32 1.0, %v860
        %v862 = vrcp.pop %v846
        %v863 = vmul.f32 %v846, %v862
        %v864 = vsub.f32 1.0, %v863
        %v865 = vmul.f32 %v862, %v864
        %v866 = vadd.f32 %v862, %v865
        %vm867 = vweird.f32 %v846
        %vm868 = vweird.f32 %v862
        %vm869 = vmor %vm867, %vm868
        %v870 = vsel %vm869, %v862, %v866
        %v871 = vand.u32 2147483647, %v846
        %vm872 = vcmp.eq.f32.partialorder %v871, 8.507059e+37
        %v873 = vand.u32 %v846, 2147483648
        %v874 = vor.u32 1.1754944e-38, %v873
        %v875 = vsel %vm872, %v874, %v870
        %v876 = vmul.f32 1.0, %v875
        %v877 = vadd.f32 %v204, %v861
        %v878 = vadd.f32 %v205, %v876
        %v879 = vmul.f32 %v204, 2.0
        %v880 = vmul.f32 %v205, 2.0
        %v881 = vmul.f32 %v879, %v861
        %v882 = vmul.f32 %v880, %v876
        %v883 = vsub.f32 %v877, %v881
        %v884 = vsub.f32 %v878, %v882
        %v885 = vmul.f32 %v835, %v883
        %v886 = vmul.f32 %v836, %v884
        %v887 = vsel %vm332, %v885, 0.0
        %v888 = vsel %vm332, %v886, 0.0
        %v889 = vadd.f32 %v887, %v888
        %890 = vadd.xlane.f32.xlu0 %v889
        %v891 = vpop.xlane.xlu0 %890
        %v892 = vrot.slane %v891, 4
        %v893 = vadd.f32 %v891, %v892
        %v894 = vrot.slane %v893, 2
        %v895 = vadd.f32 %v893, %v894
        %v896 = vrot.slane %v895, 1
        %v897 = vadd.f32 %v895, %v896
        %s898 = vtos %v897
        %v899 = vstv %s898
        %vm900 = vcmask 0
        %901 = vst.msk [vmem:[%s203] sm:$0x1] %vm900, %v899
        %p902 = scmp.lt.s32.totalorder %s19, 1
        %s903 = scalar_select %p902, %s19, 1
        %s904 = scalar_lea.vmem %s2, %s903
        // Predicated region
        $region37: #{tpu_custom_call.1} parent=27 // pred_check
          %p905 = pneg %p89
        $region38: #{tpu_custom_call.1} parent=27 // pred_check_branch
          %907 = sbr.rel (%p905) target = $region40
        $region39: #{tpu_custom_call.1} parent=27 // pred_region
          _
        $region40: #{tpu_custom_call.1} parent=27 // pred_fallthru
          _
      $region28: #{tpu_custom_call.1} parent=5 // pred_fallthru
        _
      %p908 = scmp.le.s32.totalorder 2, %s14
      // Predicated region
      $region41: #{tpu_custom_call.1} parent=5 // pred_check
        %p909 = pneg %p908
      $region42: #{tpu_custom_call.1} parent=5 // pred_check_branch
        %911 = sbr.rel (%p909) target = $region44
      $region43: #{tpu_custom_call.1} parent=5 // pred_region
        %s912 = ssub.s32 %s14, 2
        // Predicated region
        $region45: #{tpu_custom_call.1} parent=43 // pred_check
          %p913 = pneg %p95
        $region46: #{tpu_custom_call.1} parent=43 // pred_check_branch
          %915 = sbr.rel (%p913) target = $region48
        $region47: #{tpu_custom_call.1} parent=43 // pred_region
          %p916 = scmp.lt.s32.totalorder %s20, 1
          %s917 = scalar_select %p916, %s20, 1
          %s918 = scalar_lea.vmem %s2, %s917
        $region48: #{tpu_custom_call.1} parent=43 // pred_fallthru
          _
      $region44: #{tpu_custom_call.1} parent=5 // pred_fallthru
        _
    $region6: #{tpu_custom_call.1} parent=1 // loop_footer
      %s18 = sadd.s32 1, %s14
    $region7: #{tpu_custom_call.1} parent=1 // loop_footer_branch
      %13 = sbr.rel target = $region3
    $region8: #{tpu_custom_call.1} parent=1 // loop_exit
      _
    %919 = vsyncpa [#allocation3], 1
    %s920 = scalar_lea.sflag [#allocation3], 1
    %921 = vsyncpa %s920, 1
    %922 = vsyncpa [#allocation5], 1
    %s923 = scalar_lea.sflag [#allocation5], 1
    %924 = vsyncpa %s923, 1

</llo_original>
